<compile_context>
chip_gen: v6e
topology: v6e:2x2x1
jax: 0.10.0
libtpu: 0.0.40
codegen_flags: <defaults>
</compile_context>

<pallas_src>
import jax
import jax.numpy as jnp
from jax.experimental import pallas as pl
from jax.experimental.pallas import tpu as pltpu

K = 5          # kernel_size of the spatial-attention conv
PAD = K // 2   # padding = 2
EPS = 1e-5     # BatchNorm eps


# ---------------------------------------------------------------------------
# Fused kernel: TB batch elements per grid step
# ---------------------------------------------------------------------------
def _make_kernel(C, H, W):
    HW = H * W
    Hp, Wp = H + 2 * PAD, W + 2 * PAD

    def kernel(x_ref, w_ref, b_ref, o_ref, pad_ref):
        """x_ref/o_ref: (TB, C, H*W) f32 VMEM; w_ref: (2*K*K,) SMEM;
        b_ref: (1,) SMEM; pad_ref: (2, TB, H+2P, W+2P) f32 VMEM scratch."""
        TB = x_ref.shape[0]

        # ---- zero only the PAD-wide border of the padded scratch ----------
        # (interior is fully overwritten below every step; border-only zeroing
        # is cheap and stays correct even if grid steps split across cores)
        pad_ref[:, :, 0:PAD, :] = jnp.zeros((2, TB, PAD, Wp), jnp.float32)
        pad_ref[:, :, Hp - PAD:Hp, :] = jnp.zeros((2, TB, PAD, Wp), jnp.float32)
        pad_ref[:, :, :, 0:PAD] = jnp.zeros((2, TB, Hp, PAD), jnp.float32)
        pad_ref[:, :, :, Wp - PAD:Wp] = jnp.zeros((2, TB, Hp, PAD), jnp.float32)

        # ---- channel mean / max on the lane-dense (TB, C, HW) layout ------
        xv = x_ref[...]                                   # (TB, C, HW)
        avg = jnp.mean(xv, axis=1)                        # (TB, HW)
        mx = jnp.max(xv, axis=1)                          # (TB, HW)

        # ---- write interiors of the padded 2-channel map (2-D for conv) ---
        pad_ref[0, :, PAD:PAD + H, PAD:PAD + W] = avg.reshape(TB, H, W)
        pad_ref[1, :, PAD:PAD + H, PAD:PAD + W] = mx.reshape(TB, H, W)

        # ---- 5x5 conv, 2 -> 1 channels: 10 row-band loads, 50 VPU FMAs ----
        # accumulator starts at the folded (conv bias + BN) bias
        acc = jnp.full((TB, H, W), b_ref[0], jnp.float32)
        for c in range(2):
            for dy in range(K):
                band = pad_ref[c, :, dy:dy + H, :]        # (TB, H, Wp), one load
                for dx in range(K):
                    wt = w_ref[(c * K + dy) * K + dx]     # scalar (SMEM)
                    acc = acc + wt * band[:, :, dx:dx + W]

        # ---- ReLU + exact sigmoid (approx recip was too lossy for the tol) -
        y = jnp.maximum(acc, 0.0)
        att = 1.0 / (1.0 + jnp.exp(-y))                   # (TB, H, W)

        # ---- out = att * x, one lane-dense store (re-reads x_ref) ---------
        o_ref[...] = att.reshape(TB, 1, HW) * x_ref[...]

    return kernel


def _pick_tile_batch(N, block_elems, target_bytes=2 << 20):
    """Largest TB dividing N with TB * block_elems * 4B <= target_bytes."""
    tb = max(1, min(N, target_bytes // max(block_elems * 4, 1)))
    while N % tb:
        tb -= 1
    return tb


# ---------------------------------------------------------------------------
# Wrapper: fold BN into the conv, launch one fused pallas_call
# ---------------------------------------------------------------------------
@jax.jit
def spatial_attention_forward(x, w, conv_b, gamma, beta, run_mean, run_var):
    """x: (N,C,H,W) f32; w: (1,2,K,K) OIHW; BN params / conv bias: shape (1,)."""
    N, C, H, W = x.shape
    HW = H * W

    # Fold conv bias + BatchNorm (inference mode, running stats) into w / b.
    # TODO(synk): training-mode BatchNorm (batch statistics) is not implemented.
    scale = gamma / jnp.sqrt(run_var + EPS)               # (1,)
    w_folded = (w[0] * scale[0]).reshape(-1)              # (2*K*K,) = (50,)
    b_folded = (conv_b - run_mean) * scale + beta         # (1,)

    TB = _pick_tile_batch(N, C * HW)
    x2 = x.reshape(N, C, HW)                              # lane-dense view for kernel

    smem = pl.BlockSpec(memory_space=pltpu.MemorySpace.SMEM)
    out2 = pl.pallas_call(
        _make_kernel(C, H, W),
        grid=(N // TB,),
        in_specs=[
            pl.BlockSpec((TB, C, HW), lambda n: (n, 0, 0)),   # TB batch elems / step
            smem,                                             # folded conv weights
            smem,                                             # folded bias
        ],
        out_specs=pl.BlockSpec((TB, C, HW), lambda n: (n, 0, 0)),
        out_shape=jax.ShapeDtypeStruct((N, C, HW), jnp.float32),
        scratch_shapes=[
            pltpu.VMEM((2, TB, H + 2 * PAD, W + 2 * PAD), jnp.float32)],
        compiler_params=pltpu.CompilerParams(
            dimension_semantics=("parallel",),    # batch axis is independent work
            vmem_limit_bytes=32 * 1024 * 1024),   # headroom for bigger blocks (v5e default is 16 MiB)
    )(x2, w_folded, b_folded)
    return out2.reshape(N, C, H, W)


# ---------------------------------------------------------------------------
# Deterministic synthetic parameters (Conv2d(2,1,5,bias=True) + BatchNorm2d(1))
# ---------------------------------------------------------------------------
def make_params(key):
    kw, kb, kg, kbe, km, kv = jax.random.split(key, 6)
    w = 0.2 * jax.random.normal(kw, (1, 2, K, K), jnp.float32)       # OIHW
    conv_b = 0.1 * jax.random.normal(kb, (1,), jnp.float32)
    gamma = 1.0 + 0.1 * jax.random.normal(kg, (1,), jnp.float32)
    beta = 0.1 * jax.random.normal(kbe, (1,), jnp.float32)
    run_mean = 0.1 * jax.random.normal(km, (1,), jnp.float32)
    run_var = 1.0 + 0.1 * jnp.abs(jax.random.normal(kv, (1,), jnp.float32))
    return w, conv_b, gamma, beta, run_mean, run_var


# ---------------------------------------------------------------------------
# Pure-JAX reference for a numerical sanity check
# ---------------------------------------------------------------------------
def reference_forward(x, w, conv_b, gamma, beta, run_mean, run_var):
    avg = jnp.mean(x, axis=1, keepdims=True)
    mx = jnp.max(x, axis=1, keepdims=True)
    cat = jnp.concatenate([avg, mx], axis=1)                          # (N,2,H,W)
    z = jax.lax.conv_general_dilated(
        cat, w, window_strides=(1, 1),
        padding=((PAD, PAD), (PAD, PAD)),
        dimension_numbers=("NCHW", "OIHW", "NCHW"))
    z = z + conv_b.reshape(1, -1, 1, 1)
    z = (z - run_mean.reshape(1, -1, 1, 1)) / jnp.sqrt(run_var.reshape(1, -1, 1, 1) + EPS)
    z = gamma.reshape(1, -1, 1, 1) * z + beta.reshape(1, -1, 1, 1)
    att = jax.nn.sigmoid(jnp.maximum(z, 0.0))
    return att * x


if __name__ == "__main__":
    key = jax.random.PRNGKey(0)
    kx, kp = jax.random.split(key)
    N, C, H, W = 2, 4, 16, 16
    x = jax.random.normal(kx, (N, C, H, W), jnp.float32)
    params = make_params(kp)

    out = spatial_attention_forward(x, *params)
    out = jax.block_until_ready(out)

    ref = reference_forward(x, *params)
    assert out.shape == (N, C, H, W), out.shape
    max_err = float(jnp.max(jnp.abs(out - ref)))
    assert max_err < 5e-3, max_err

    print("KERNEL_OK")
</pallas_src>

<mosaic_0001>
module attributes {stable_mosaic.version = 11 : i64} {
  func.func @kernel(%arg0: i32, %arg1: memref<2x4x256xf32, #tpu.memory_space<vmem>>, %arg2: memref<50xf32, #tpu.memory_space<smem>>, %arg3: memref<1xf32, #tpu.memory_space<smem>>, %arg4: memref<2x4x256xf32, #tpu.memory_space<vmem>>, %arg5: memref<2x2x20x20xf32, #tpu.memory_space<vmem>>) attributes {dimension_semantics = [#tpu.dimension_semantics<parallel>], iteration_bounds = array<i64: 1>, scalar_prefetch = 0 : i64, scratch_operands = 1 : i64, tpu.core_type = #tpu.core_type<tc>, window_params = [{transform_indices = @transform_0, window_bounds = array<i64: 2, 4, 256>}, {transform_indices = @transform_1, window_bounds = array<i64: 50>}, {transform_indices = @transform_2, window_bounds = array<i64: 1>}, {transform_indices = @transform_3, window_bounds = array<i64: 2, 4, 256>}]} {
    %cst = arith.constant 0.000000e+00 : f32
    %0 = vector.broadcast %cst : f32 to vector<2x2x2x20xf32>
    %c0 = arith.constant 0 : index
    %c0_0 = arith.constant 0 : index
    %c0_1 = arith.constant 0 : index
    %c0_2 = arith.constant 0 : index
    %1 = vector.load %arg5[%c0, %c0_0, %c0_1, %c0_2] : memref<2x2x20x20xf32, #tpu.memory_space<vmem>>, vector<2x2x2x20xf32>
    tpu.vector_store %arg5[%c0, %c0_0, %c0_1, %c0_2], %0 {strides = array<i32>} : memref<2x2x20x20xf32, #tpu.memory_space<vmem>>, vector<2x2x2x20xf32>,
    %cst_3 = arith.constant 0.000000e+00 : f32
    %2 = vector.broadcast %cst_3 : f32 to vector<2x2x2x20xf32>
    %c0_4 = arith.constant 0 : index
    %c0_5 = arith.constant 0 : index
    %c18 = arith.constant 18 : index
    %c0_6 = arith.constant 0 : index
    %3 = vector.load %arg5[%c0_4, %c0_5, %c18, %c0_6] : memref<2x2x20x20xf32, #tpu.memory_space<vmem>>, vector<2x2x2x20xf32>
    tpu.vector_store %arg5[%c0_4, %c0_5, %c18, %c0_6], %2 {strides = array<i32>} : memref<2x2x20x20xf32, #tpu.memory_space<vmem>>, vector<2x2x2x20xf32>,
    %cst_7 = arith.constant 0.000000e+00 : f32
    %4 = vector.broadcast %cst_7 : f32 to vector<2x2x20x2xf32>
    %c0_8 = arith.constant 0 : index
    %c0_9 = arith.constant 0 : index
    %c0_10 = arith.constant 0 : index
    %c0_11 = arith.constant 0 : index
    %5 = vector.load %arg5[%c0_8, %c0_9, %c0_10, %c0_11] : memref<2x2x20x20xf32, #tpu.memory_space<vmem>>, vector<2x2x20x2xf32>
    tpu.vector_store %arg5[%c0_8, %c0_9, %c0_10, %c0_11], %4 {strides = array<i32>} : memref<2x2x20x20xf32, #tpu.memory_space<vmem>>, vector<2x2x20x2xf32>,
    %cst_12 = arith.constant 0.000000e+00 : f32
    %6 = vector.broadcast %cst_12 : f32 to vector<2x2x20x2xf32>
    %c0_13 = arith.constant 0 : index
    %c0_14 = arith.constant 0 : index
    %c0_15 = arith.constant 0 : index
    %c18_16 = arith.constant 18 : index
    %7 = vector.load %arg5[%c0_13, %c0_14, %c0_15, %c18_16] : memref<2x2x20x20xf32, #tpu.memory_space<vmem>>, vector<2x2x20x2xf32>
    tpu.vector_store %arg5[%c0_13, %c0_14, %c0_15, %c18_16], %6 {strides = array<i32>} : memref<2x2x20x20xf32, #tpu.memory_space<vmem>>, vector<2x2x20x2xf32>,
    %c0_17 = arith.constant 0 : index
    %c0_18 = arith.constant 0 : index
    %c0_19 = arith.constant 0 : index
    %8 = vector.load %arg1[%c0_17, %c0_18, %c0_19] : memref<2x4x256xf32, #tpu.memory_space<vmem>>, vector<2x4x256xf32>
    %cst_20 = arith.constant dense<0.000000e+00> : vector<2x256xf32>
    %9 = vector.multi_reduction <add>, %8, %cst_20 [1] : vector<2x4x256xf32> to vector<2x256xf32>
    %cst_21 = arith.constant 4.000000e+00 : f32
    %10 = vector.broadcast %cst_21 : f32 to vector<2x256xf32>
    %11 = arith.divf %9, %10 : vector<2x256xf32>
    %cst_22 = arith.constant dense<0xFF800000> : vector<2x256xf32>
    %12 = vector.multi_reduction <maximumf>, %8, %cst_22 [1] : vector<2x4x256xf32> to vector<2x256xf32>
    %13 = vector.shape_cast %11 : vector<2x256xf32> to vector<2x16x16xf32>
    %c0_23 = arith.constant 0 : index
    %c0_24 = arith.constant 0 : index
    %c2 = arith.constant 2 : index
    %c2_25 = arith.constant 2 : index
    %14 = vector.load %arg5[%c0_23, %c0_24, %c2, %c2_25] : memref<2x2x20x20xf32, #tpu.memory_space<vmem>>, vector<1x2x16x16xf32>
    %15 = vector.shape_cast %14 : vector<1x2x16x16xf32> to vector<2x16x16xf32>
    %16 = vector.shape_cast %13 : vector<2x16x16xf32> to vector<1x2x16x16xf32>
    tpu.vector_store %arg5[%c0_23, %c0_24, %c2, %c2_25], %16 {strides = array<i32>} : memref<2x2x20x20xf32, #tpu.memory_space<vmem>>, vector<1x2x16x16xf32>,
    %17 = vector.shape_cast %12 : vector<2x256xf32> to vector<2x16x16xf32>
    %c1 = arith.constant 1 : index
    %c0_26 = arith.constant 0 : index
    %c2_27 = arith.constant 2 : index
    %c2_28 = arith.constant 2 : index
    %18 = vector.load %arg5[%c1, %c0_26, %c2_27, %c2_28] : memref<2x2x20x20xf32, #tpu.memory_space<vmem>>, vector<1x2x16x16xf32>
    %19 = vector.shape_cast %18 : vector<1x2x16x16xf32> to vector<2x16x16xf32>
    %20 = vector.shape_cast %17 : vector<2x16x16xf32> to vector<1x2x16x16xf32>
    tpu.vector_store %arg5[%c1, %c0_26, %c2_27, %c2_28], %20 {strides = array<i32>} : memref<2x2x20x20xf32, #tpu.memory_space<vmem>>, vector<1x2x16x16xf32>,
    %c0_29 = arith.constant 0 : index
    %21 = memref.load %arg3[%c0_29] : memref<1xf32, #tpu.memory_space<smem>>
    %22 = vector.broadcast %21 : f32 to vector<2x16x16xf32>
    %c0_30 = arith.constant 0 : index
    %c0_31 = arith.constant 0 : index
    %c0_32 = arith.constant 0 : index
    %c0_33 = arith.constant 0 : index
    %23 = vector.load %arg5[%c0_30, %c0_31, %c0_32, %c0_33] : memref<2x2x20x20xf32, #tpu.memory_space<vmem>>, vector<1x2x16x20xf32>
    %24 = vector.shape_cast %23 : vector<1x2x16x20xf32> to vector<2x16x20xf32>
    %c0_34 = arith.constant 0 : index
    %25 = memref.load %arg2[%c0_34] : memref<50xf32, #tpu.memory_space<smem>>
    %26 = vector.extract_strided_slice %24 {offsets = [0, 0, 0], sizes = [2, 16, 16], strides = [1, 1, 1]} : vector<2x16x20xf32> to vector<2x16x16xf32>
    %27 = vector.broadcast %25 : f32 to vector<2x16x16xf32>
    %28 = arith.mulf %27, %26 : vector<2x16x16xf32>
    %29 = arith.addf %22, %28 : vector<2x16x16xf32>
    %c1_35 = arith.constant 1 : index
    %30 = memref.load %arg2[%c1_35] : memref<50xf32, #tpu.memory_space<smem>>
    %31 = vector.extract_strided_slice %24 {offsets = [0, 0, 1], sizes = [2, 16, 16], strides = [1, 1, 1]} : vector<2x16x20xf32> to vector<2x16x16xf32>
    %32 = vector.broadcast %30 : f32 to vector<2x16x16xf32>
    %33 = arith.mulf %32, %31 : vector<2x16x16xf32>
    %34 = arith.addf %29, %33 : vector<2x16x16xf32>
    %c2_36 = arith.constant 2 : index
    %35 = memref.load %arg2[%c2_36] : memref<50xf32, #tpu.memory_space<smem>>
    %36 = vector.extract_strided_slice %24 {offsets = [0, 0, 2], sizes = [2, 16, 16], strides = [1, 1, 1]} : vector<2x16x20xf32> to vector<2x16x16xf32>
    %37 = vector.broadcast %35 : f32 to vector<2x16x16xf32>
    %38 = arith.mulf %37, %36 : vector<2x16x16xf32>
    %39 = arith.addf %34, %38 : vector<2x16x16xf32>
    %c3 = arith.constant 3 : index
    %40 = memref.load %arg2[%c3] : memref<50xf32, #tpu.memory_space<smem>>
    %41 = vector.extract_strided_slice %24 {offsets = [0, 0, 3], sizes = [2, 16, 16], strides = [1, 1, 1]} : vector<2x16x20xf32> to vector<2x16x16xf32>
    %42 = vector.broadcast %40 : f32 to vector<2x16x16xf32>
    %43 = arith.mulf %42, %41 : vector<2x16x16xf32>
    %44 = arith.addf %39, %43 : vector<2x16x16xf32>
    %c4 = arith.constant 4 : index
    %45 = memref.load %arg2[%c4] : memref<50xf32, #tpu.memory_space<smem>>
    %46 = vector.extract_strided_slice %24 {offsets = [0, 0, 4], sizes = [2, 16, 16], strides = [1, 1, 1]} : vector<2x16x20xf32> to vector<2x16x16xf32>
    %47 = vector.broadcast %45 : f32 to vector<2x16x16xf32>
    %48 = arith.mulf %47, %46 : vector<2x16x16xf32>
    %49 = arith.addf %44, %48 : vector<2x16x16xf32>
    %c0_37 = arith.constant 0 : index
    %c0_38 = arith.constant 0 : index
    %c1_39 = arith.constant 1 : index
    %c0_40 = arith.constant 0 : index
    %50 = vector.load %arg5[%c0_37, %c0_38, %c1_39, %c0_40] : memref<2x2x20x20xf32, #tpu.memory_space<vmem>>, vector<1x2x16x20xf32>
    %51 = vector.shape_cast %50 : vector<1x2x16x20xf32> to vector<2x16x20xf32>
    %c5 = arith.constant 5 : index
    %52 = memref.load %arg2[%c5] : memref<50xf32, #tpu.memory_space<smem>>
    %53 = vector.extract_strided_slice %51 {offsets = [0, 0, 0], sizes = [2, 16, 16], strides = [1, 1, 1]} : vector<2x16x20xf32> to vector<2x16x16xf32>
    %54 = vector.broadcast %52 : f32 to vector<2x16x16xf32>
    %55 = arith.mulf %54, %53 : vector<2x16x16xf32>
    %56 = arith.addf %49, %55 : vector<2x16x16xf32>
    %c6 = arith.constant 6 : index
    %57 = memref.load %arg2[%c6] : memref<50xf32, #tpu.memory_space<smem>>
    %58 = vector.extract_strided_slice %51 {offsets = [0, 0, 1], sizes = [2, 16, 16], strides = [1, 1, 1]} : vector<2x16x20xf32> to vector<2x16x16xf32>
    %59 = vector.broadcast %57 : f32 to vector<2x16x16xf32>
    %60 = arith.mulf %59, %58 : vector<2x16x16xf32>
    %61 = arith.addf %56, %60 : vector<2x16x16xf32>
    %c7 = arith.constant 7 : index
    %62 = memref.load %arg2[%c7] : memref<50xf32, #tpu.memory_space<smem>>
    %63 = vector.extract_strided_slice %51 {offsets = [0, 0, 2], sizes = [2, 16, 16], strides = [1, 1, 1]} : vector<2x16x20xf32> to vector<2x16x16xf32>
    %64 = vector.broadcast %62 : f32 to vector<2x16x16xf32>
    %65 = arith.mulf %64, %63 : vector<2x16x16xf32>
    %66 = arith.addf %61, %65 : vector<2x16x16xf32>
    %c8 = arith.constant 8 : index
    %67 = memref.load %arg2[%c8] : memref<50xf32, #tpu.memory_space<smem>>
    %68 = vector.extract_strided_slice %51 {offsets = [0, 0, 3], sizes = [2, 16, 16], strides = [1, 1, 1]} : vector<2x16x20xf32> to vector<2x16x16xf32>
    %69 = vector.broadcast %67 : f32 to vector<2x16x16xf32>
    %70 = arith.mulf %69, %68 : vector<2x16x16xf32>
    %71 = arith.addf %66, %70 : vector<2x16x16xf32>
    %c9 = arith.constant 9 : index
    %72 = memref.load %arg2[%c9] : memref<50xf32, #tpu.memory_space<smem>>
    %73 = vector.extract_strided_slice %51 {offsets = [0, 0, 4], sizes = [2, 16, 16], strides = [1, 1, 1]} : vector<2x16x20xf32> to vector<2x16x16xf32>
    %74 = vector.broadcast %72 : f32 to vector<2x16x16xf32>
    %75 = arith.mulf %74, %73 : vector<2x16x16xf32>
    %76 = arith.addf %71, %75 : vector<2x16x16xf32>
    %c0_41 = arith.constant 0 : index
    %c0_42 = arith.constant 0 : index
    %c2_43 = arith.constant 2 : index
    %c0_44 = arith.constant 0 : index
    %77 = vector.load %arg5[%c0_41, %c0_42, %c2_43, %c0_44] : memref<2x2x20x20xf32, #tpu.memory_space<vmem>>, vector<1x2x16x20xf32>
    %78 = vector.shape_cast %77 : vector<1x2x16x20xf32> to vector<2x16x20xf32>
    %c10 = arith.constant 10 : index
    %79 = memref.load %arg2[%c10] : memref<50xf32, #tpu.memory_space<smem>>
    %80 = vector.extract_strided_slice %78 {offsets = [0, 0, 0], sizes = [2, 16, 16], strides = [1, 1, 1]} : vector<2x16x20xf32> to vector<2x16x16xf32>
    %81 = vector.broadcast %79 : f32 to vector<2x16x16xf32>
    %82 = arith.mulf %81, %80 : vector<2x16x16xf32>
    %83 = arith.addf %76, %82 : vector<2x16x16xf32>
    %c11 = arith.constant 11 : index
    %84 = memref.load %arg2[%c11] : memref<50xf32, #tpu.memory_space<smem>>
    %85 = vector.extract_strided_slice %78 {offsets = [0, 0, 1], sizes = [2, 16, 16], strides = [1, 1, 1]} : vector<2x16x20xf32> to vector<2x16x16xf32>
    %86 = vector.broadcast %84 : f32 to vector<2x16x16xf32>
    %87 = arith.mulf %86, %85 : vector<2x16x16xf32>
    %88 = arith.addf %83, %87 : vector<2x16x16xf32>
    %c12 = arith.constant 12 : index
    %89 = memref.load %arg2[%c12] : memref<50xf32, #tpu.memory_space<smem>>
    %90 = vector.extract_strided_slice %78 {offsets = [0, 0, 2], sizes = [2, 16, 16], strides = [1, 1, 1]} : vector<2x16x20xf32> to vector<2x16x16xf32>
    %91 = vector.broadcast %89 : f32 to vector<2x16x16xf32>
    %92 = arith.mulf %91, %90 : vector<2x16x16xf32>
    %93 = arith.addf %88, %92 : vector<2x16x16xf32>
    %c13 = arith.constant 13 : index
    %94 = memref.load %arg2[%c13] : memref<50xf32, #tpu.memory_space<smem>>
    %95 = vector.extract_strided_slice %78 {offsets = [0, 0, 3], sizes = [2, 16, 16], strides = [1, 1, 1]} : vector<2x16x20xf32> to vector<2x16x16xf32>
    %96 = vector.broadcast %94 : f32 to vector<2x16x16xf32>
    %97 = arith.mulf %96, %95 : vector<2x16x16xf32>
    %98 = arith.addf %93, %97 : vector<2x16x16xf32>
    %c14 = arith.constant 14 : index
    %99 = memref.load %arg2[%c14] : memref<50xf32, #tpu.memory_space<smem>>
    %100 = vector.extract_strided_slice %78 {offsets = [0, 0, 4], sizes = [2, 16, 16], strides = [1, 1, 1]} : vector<2x16x20xf32> to vector<2x16x16xf32>
    %101 = vector.broadcast %99 : f32 to vector<2x16x16xf32>
    %102 = arith.mulf %101, %100 : vector<2x16x16xf32>
    %103 = arith.addf %98, %102 : vector<2x16x16xf32>
    %c0_45 = arith.constant 0 : index
    %c0_46 = arith.constant 0 : index
    %c3_47 = arith.constant 3 : index
    %c0_48 = arith.constant 0 : index
    %104 = vector.load %arg5[%c0_45, %c0_46, %c3_47, %c0_48] : memref<2x2x20x20xf32, #tpu.memory_space<vmem>>, vector<1x2x16x20xf32>
    %105 = vector.shape_cast %104 : vector<1x2x16x20xf32> to vector<2x16x20xf32>
    %c15 = arith.constant 15 : index
    %106 = memref.load %arg2[%c15] : memref<50xf32, #tpu.memory_space<smem>>
    %107 = vector.extract_strided_slice %105 {offsets = [0, 0, 0], sizes = [2, 16, 16], strides = [1, 1, 1]} : vector<2x16x20xf32> to vector<2x16x16xf32>
    %108 = vector.broadcast %106 : f32 to vector<2x16x16xf32>
    %109 = arith.mulf %108, %107 : vector<2x16x16xf32>
    %110 = arith.addf %103, %109 : vector<2x16x16xf32>
    %c16 = arith.constant 16 : index
    %111 = memref.load %arg2[%c16] : memref<50xf32, #tpu.memory_space<smem>>
    %112 = vector.extract_strided_slice %105 {offsets = [0, 0, 1], sizes = [2, 16, 16], strides = [1, 1, 1]} : vector<2x16x20xf32> to vector<2x16x16xf32>
    %113 = vector.broadcast %111 : f32 to vector<2x16x16xf32>
    %114 = arith.mulf %113, %112 : vector<2x16x16xf32>
    %115 = arith.addf %110, %114 : vector<2x16x16xf32>
    %c17 = arith.constant 17 : index
    %116 = memref.load %arg2[%c17] : memref<50xf32, #tpu.memory_space<smem>>
    %117 = vector.extract_strided_slice %105 {offsets = [0, 0, 2], sizes = [2, 16, 16], strides = [1, 1, 1]} : vector<2x16x20xf32> to vector<2x16x16xf32>
    %118 = vector.broadcast %116 : f32 to vector<2x16x16xf32>
    %119 = arith.mulf %118, %117 : vector<2x16x16xf32>
    %120 = arith.addf %115, %119 : vector<2x16x16xf32>
    %c18_49 = arith.constant 18 : index
    %121 = memref.load %arg2[%c18_49] : memref<50xf32, #tpu.memory_space<smem>>
    %122 = vector.extract_strided_slice %105 {offsets = [0, 0, 3], sizes = [2, 16, 16], strides = [1, 1, 1]} : vector<2x16x20xf32> to vector<2x16x16xf32>
    %123 = vector.broadcast %121 : f32 to vector<2x16x16xf32>
    %124 = arith.mulf %123, %122 : vector<2x16x16xf32>
    %125 = arith.addf %120, %124 : vector<2x16x16xf32>
    %c19 = arith.constant 19 : index
    %126 = memref.load %arg2[%c19] : memref<50xf32, #tpu.memory_space<smem>>
    %127 = vector.extract_strided_slice %105 {offsets = [0, 0, 4], sizes = [2, 16, 16], strides = [1, 1, 1]} : vector<2x16x20xf32> to vector<2x16x16xf32>
    %128 = vector.broadcast %126 : f32 to vector<2x16x16xf32>
    %129 = arith.mulf %128, %127 : vector<2x16x16xf32>
    %130 = arith.addf %125, %129 : vector<2x16x16xf32>
    %c0_50 = arith.constant 0 : index
    %c0_51 = arith.constant 0 : index
    %c4_52 = arith.constant 4 : index
    %c0_53 = arith.constant 0 : index
    %131 = vector.load %arg5[%c0_50, %c0_51, %c4_52, %c0_53] : memref<2x2x20x20xf32, #tpu.memory_space<vmem>>, vector<1x2x16x20xf32>
    %132 = vector.shape_cast %131 : vector<1x2x16x20xf32> to vector<2x16x20xf32>
    %c20 = arith.constant 20 : index
    %133 = memref.load %arg2[%c20] : memref<50xf32, #tpu.memory_space<smem>>
    %134 = vector.extract_strided_slice %132 {offsets = [0, 0, 0], sizes = [2, 16, 16], strides = [1, 1, 1]} : vector<2x16x20xf32> to vector<2x16x16xf32>
    %135 = vector.broadcast %133 : f32 to vector<2x16x16xf32>
    %136 = arith.mulf %135, %134 : vector<2x16x16xf32>
    %137 = arith.addf %130, %136 : vector<2x16x16xf32>
    %c21 = arith.constant 21 : index
    %138 = memref.load %arg2[%c21] : memref<50xf32, #tpu.memory_space<smem>>
    %139 = vector.extract_strided_slice %132 {offsets = [0, 0, 1], sizes = [2, 16, 16], strides = [1, 1, 1]} : vector<2x16x20xf32> to vector<2x16x16xf32>
    %140 = vector.broadcast %138 : f32 to vector<2x16x16xf32>
    %141 = arith.mulf %140, %139 : vector<2x16x16xf32>
    %142 = arith.addf %137, %141 : vector<2x16x16xf32>
    %c22 = arith.constant 22 : index
    %143 = memref.load %arg2[%c22] : memref<50xf32, #tpu.memory_space<smem>>
    %144 = vector.extract_strided_slice %132 {offsets = [0, 0, 2], sizes = [2, 16, 16], strides = [1, 1, 1]} : vector<2x16x20xf32> to vector<2x16x16xf32>
    %145 = vector.broadcast %143 : f32 to vector<2x16x16xf32>
    %146 = arith.mulf %145, %144 : vector<2x16x16xf32>
    %147 = arith.addf %142, %146 : vector<2x16x16xf32>
    %c23 = arith.constant 23 : index
    %148 = memref.load %arg2[%c23] : memref<50xf32, #tpu.memory_space<smem>>
    %149 = vector.extract_strided_slice %132 {offsets = [0, 0, 3], sizes = [2, 16, 16], strides = [1, 1, 1]} : vector<2x16x20xf32> to vector<2x16x16xf32>
    %150 = vector.broadcast %148 : f32 to vector<2x16x16xf32>
    %151 = arith.mulf %150, %149 : vector<2x16x16xf32>
    %152 = arith.addf %147, %151 : vector<2x16x16xf32>
    %c24 = arith.constant 24 : index
    %153 = memref.load %arg2[%c24] : memref<50xf32, #tpu.memory_space<smem>>
    %154 = vector.extract_strided_slice %132 {offsets = [0, 0, 4], sizes = [2, 16, 16], strides = [1, 1, 1]} : vector<2x16x20xf32> to vector<2x16x16xf32>
    %155 = vector.broadcast %153 : f32 to vector<2x16x16xf32>
    %156 = arith.mulf %155, %154 : vector<2x16x16xf32>
    %157 = arith.addf %152, %156 : vector<2x16x16xf32>
    %c1_54 = arith.constant 1 : index
    %c0_55 = arith.constant 0 : index
    %c0_56 = arith.constant 0 : index
    %c0_57 = arith.constant 0 : index
    %158 = vector.load %arg5[%c1_54, %c0_55, %c0_56, %c0_57] : memref<2x2x20x20xf32, #tpu.memory_space<vmem>>, vector<1x2x16x20xf32>
    %159 = vector.shape_cast %158 : vector<1x2x16x20xf32> to vector<2x16x20xf32>
    %c25 = arith.constant 25 : index
    %160 = memref.load %arg2[%c25] : memref<50xf32, #tpu.memory_space<smem>>
    %161 = vector.extract_strided_slice %159 {offsets = [0, 0, 0], sizes = [2, 16, 16], strides = [1, 1, 1]} : vector<2x16x20xf32> to vector<2x16x16xf32>
    %162 = vector.broadcast %160 : f32 to vector<2x16x16xf32>
    %163 = arith.mulf %162, %161 : vector<2x16x16xf32>
    %164 = arith.addf %157, %163 : vector<2x16x16xf32>
    %c26 = arith.constant 26 : index
    %165 = memref.load %arg2[%c26] : memref<50xf32, #tpu.memory_space<smem>>
    %166 = vector.extract_strided_slice %159 {offsets = [0, 0, 1], sizes = [2, 16, 16], strides = [1, 1, 1]} : vector<2x16x20xf32> to vector<2x16x16xf32>
    %167 = vector.broadcast %165 : f32 to vector<2x16x16xf32>
    %168 = arith.mulf %167, %166 : vector<2x16x16xf32>
    %169 = arith.addf %164, %168 : vector<2x16x16xf32>
    %c27 = arith.constant 27 : index
    %170 = memref.load %arg2[%c27] : memref<50xf32, #tpu.memory_space<smem>>
    %171 = vector.extract_strided_slice %159 {offsets = [0, 0, 2], sizes = [2, 16, 16], strides = [1, 1, 1]} : vector<2x16x20xf32> to vector<2x16x16xf32>
    %172 = vector.broadcast %170 : f32 to vector<2x16x16xf32>
    %173 = arith.mulf %172, %171 : vector<2x16x16xf32>
    %174 = arith.addf %169, %173 : vector<2x16x16xf32>
    %c28 = arith.constant 28 : index
    %175 = memref.load %arg2[%c28] : memref<50xf32, #tpu.memory_space<smem>>
    %176 = vector.extract_strided_slice %159 {offsets = [0, 0, 3], sizes = [2, 16, 16], strides = [1, 1, 1]} : vector<2x16x20xf32> to vector<2x16x16xf32>
    %177 = vector.broadcast %175 : f32 to vector<2x16x16xf32>
    %178 = arith.mulf %177, %176 : vector<2x16x16xf32>
    %179 = arith.addf %174, %178 : vector<2x16x16xf32>
    %c29 = arith.constant 29 : index
    %180 = memref.load %arg2[%c29] : memref<50xf32, #tpu.memory_space<smem>>
    %181 = vector.extract_strided_slice %159 {offsets = [0, 0, 4], sizes = [2, 16, 16], strides = [1, 1, 1]} : vector<2x16x20xf32> to vector<2x16x16xf32>
    %182 = vector.broadcast %180 : f32 to vector<2x16x16xf32>
    %183 = arith.mulf %182, %181 : vector<2x16x16xf32>
    %184 = arith.addf %179, %183 : vector<2x16x16xf32>
    %c1_58 = arith.constant 1 : index
    %c0_59 = arith.constant 0 : index
    %c1_60 = arith.constant 1 : index
    %c0_61 = arith.constant 0 : index
    %185 = vector.load %arg5[%c1_58, %c0_59, %c1_60, %c0_61] : memref<2x2x20x20xf32, #tpu.memory_space<vmem>>, vector<1x2x16x20xf32>
    %186 = vector.shape_cast %185 : vector<1x2x16x20xf32> to vector<2x16x20xf32>
    %c30 = arith.constant 30 : index
    %187 = memref.load %arg2[%c30] : memref<50xf32, #tpu.memory_space<smem>>
    %188 = vector.extract_strided_slice %186 {offsets = [0, 0, 0], sizes = [2, 16, 16], strides = [1, 1, 1]} : vector<2x16x20xf32> to vector<2x16x16xf32>
    %189 = vector.broadcast %187 : f32 to vector<2x16x16xf32>
    %190 = arith.mulf %189, %188 : vector<2x16x16xf32>
    %191 = arith.addf %184, %190 : vector<2x16x16xf32>
    %c31 = arith.constant 31 : index
    %192 = memref.load %arg2[%c31] : memref<50xf32, #tpu.memory_space<smem>>
    %193 = vector.extract_strided_slice %186 {offsets = [0, 0, 1], sizes = [2, 16, 16], strides = [1, 1, 1]} : vector<2x16x20xf32> to vector<2x16x16xf32>
    %194 = vector.broadcast %192 : f32 to vector<2x16x16xf32>
    %195 = arith.mulf %194, %193 : vector<2x16x16xf32>
    %196 = arith.addf %191, %195 : vector<2x16x16xf32>
    %c32 = arith.constant 32 : index
    %197 = memref.load %arg2[%c32] : memref<50xf32, #tpu.memory_space<smem>>
    %198 = vector.extract_strided_slice %186 {offsets = [0, 0, 2], sizes = [2, 16, 16], strides = [1, 1, 1]} : vector<2x16x20xf32> to vector<2x16x16xf32>
    %199 = vector.broadcast %197 : f32 to vector<2x16x16xf32>
    %200 = arith.mulf %199, %198 : vector<2x16x16xf32>
    %201 = arith.addf %196, %200 : vector<2x16x16xf32>
    %c33 = arith.constant 33 : index
    %202 = memref.load %arg2[%c33] : memref<50xf32, #tpu.memory_space<smem>>
    %203 = vector.extract_strided_slice %186 {offsets = [0, 0, 3], sizes = [2, 16, 16], strides = [1, 1, 1]} : vector<2x16x20xf32> to vector<2x16x16xf32>
    %204 = vector.broadcast %202 : f32 to vector<2x16x16xf32>
    %205 = arith.mulf %204, %203 : vector<2x16x16xf32>
    %206 = arith.addf %201, %205 : vector<2x16x16xf32>
    %c34 = arith.constant 34 : index
    %207 = memref.load %arg2[%c34] : memref<50xf32, #tpu.memory_space<smem>>
    %208 = vector.extract_strided_slice %186 {offsets = [0, 0, 4], sizes = [2, 16, 16], strides = [1, 1, 1]} : vector<2x16x20xf32> to vector<2x16x16xf32>
    %209 = vector.broadcast %207 : f32 to vector<2x16x16xf32>
    %210 = arith.mulf %209, %208 : vector<2x16x16xf32>
    %211 = arith.addf %206, %210 : vector<2x16x16xf32>
    %c1_62 = arith.constant 1 : index
    %c0_63 = arith.constant 0 : index
    %c2_64 = arith.constant 2 : index
    %c0_65 = arith.constant 0 : index
    %212 = vector.load %arg5[%c1_62, %c0_63, %c2_64, %c0_65] : memref<2x2x20x20xf32, #tpu.memory_space<vmem>>, vector<1x2x16x20xf32>
    %213 = vector.shape_cast %212 : vector<1x2x16x20xf32> to vector<2x16x20xf32>
    %c35 = arith.constant 35 : index
    %214 = memref.load %arg2[%c35] : memref<50xf32, #tpu.memory_space<smem>>
    %215 = vector.extract_strided_slice %213 {offsets = [0, 0, 0], sizes = [2, 16, 16], strides = [1, 1, 1]} : vector<2x16x20xf32> to vector<2x16x16xf32>
    %216 = vector.broadcast %214 : f32 to vector<2x16x16xf32>
    %217 = arith.mulf %216, %215 : vector<2x16x16xf32>
    %218 = arith.addf %211, %217 : vector<2x16x16xf32>
    %c36 = arith.constant 36 : index
    %219 = memref.load %arg2[%c36] : memref<50xf32, #tpu.memory_space<smem>>
    %220 = vector.extract_strided_slice %213 {offsets = [0, 0, 1], sizes = [2, 16, 16], strides = [1, 1, 1]} : vector<2x16x20xf32> to vector<2x16x16xf32>
    %221 = vector.broadcast %219 : f32 to vector<2x16x16xf32>
    %222 = arith.mulf %221, %220 : vector<2x16x16xf32>
    %223 = arith.addf %218, %222 : vector<2x16x16xf32>
    %c37 = arith.constant 37 : index
    %224 = memref.load %arg2[%c37] : memref<50xf32, #tpu.memory_space<smem>>
    %225 = vector.extract_strided_slice %213 {offsets = [0, 0, 2], sizes = [2, 16, 16], strides = [1, 1, 1]} : vector<2x16x20xf32> to vector<2x16x16xf32>
    %226 = vector.broadcast %224 : f32 to vector<2x16x16xf32>
    %227 = arith.mulf %226, %225 : vector<2x16x16xf32>
    %228 = arith.addf %223, %227 : vector<2x16x16xf32>
    %c38 = arith.constant 38 : index
    %229 = memref.load %arg2[%c38] : memref<50xf32, #tpu.memory_space<smem>>
    %230 = vector.extract_strided_slice %213 {offsets = [0, 0, 3], sizes = [2, 16, 16], strides = [1, 1, 1]} : vector<2x16x20xf32> to vector<2x16x16xf32>
    %231 = vector.broadcast %229 : f32 to vector<2x16x16xf32>
    %232 = arith.mulf %231, %230 : vector<2x16x16xf32>
    %233 = arith.addf %228, %232 : vector<2x16x16xf32>
    %c39 = arith.constant 39 : index
    %234 = memref.load %arg2[%c39] : memref<50xf32, #tpu.memory_space<smem>>
    %235 = vector.extract_strided_slice %213 {offsets = [0, 0, 4], sizes = [2, 16, 16], strides = [1, 1, 1]} : vector<2x16x20xf32> to vector<2x16x16xf32>
    %236 = vector.broadcast %234 : f32 to vector<2x16x16xf32>
    %237 = arith.mulf %236, %235 : vector<2x16x16xf32>
    %238 = arith.addf %233, %237 : vector<2x16x16xf32>
    %c1_66 = arith.constant 1 : index
    %c0_67 = arith.constant 0 : index
    %c3_68 = arith.constant 3 : index
    %c0_69 = arith.constant 0 : index
    %239 = vector.load %arg5[%c1_66, %c0_67, %c3_68, %c0_69] : memref<2x2x20x20xf32, #tpu.memory_space<vmem>>, vector<1x2x16x20xf32>
    %240 = vector.shape_cast %239 : vector<1x2x16x20xf32> to vector<2x16x20xf32>
    %c40 = arith.constant 40 : index
    %241 = memref.load %arg2[%c40] : memref<50xf32, #tpu.memory_space<smem>>
    %242 = vector.extract_strided_slice %240 {offsets = [0, 0, 0], sizes = [2, 16, 16], strides = [1, 1, 1]} : vector<2x16x20xf32> to vector<2x16x16xf32>
    %243 = vector.broadcast %241 : f32 to vector<2x16x16xf32>
    %244 = arith.mulf %243, %242 : vector<2x16x16xf32>
    %245 = arith.addf %238, %244 : vector<2x16x16xf32>
    %c41 = arith.constant 41 : index
    %246 = memref.load %arg2[%c41] : memref<50xf32, #tpu.memory_space<smem>>
    %247 = vector.extract_strided_slice %240 {offsets = [0, 0, 1], sizes = [2, 16, 16], strides = [1, 1, 1]} : vector<2x16x20xf32> to vector<2x16x16xf32>
    %248 = vector.broadcast %246 : f32 to vector<2x16x16xf32>
    %249 = arith.mulf %248, %247 : vector<2x16x16xf32>
    %250 = arith.addf %245, %249 : vector<2x16x16xf32>
    %c42 = arith.constant 42 : index
    %251 = memref.load %arg2[%c42] : memref<50xf32, #tpu.memory_space<smem>>
    %252 = vector.extract_strided_slice %240 {offsets = [0, 0, 2], sizes = [2, 16, 16], strides = [1, 1, 1]} : vector<2x16x20xf32> to vector<2x16x16xf32>
    %253 = vector.broadcast %251 : f32 to vector<2x16x16xf32>
    %254 = arith.mulf %253, %252 : vector<2x16x16xf32>
    %255 = arith.addf %250, %254 : vector<2x16x16xf32>
    %c43 = arith.constant 43 : index
    %256 = memref.load %arg2[%c43] : memref<50xf32, #tpu.memory_space<smem>>
    %257 = vector.extract_strided_slice %240 {offsets = [0, 0, 3], sizes = [2, 16, 16], strides = [1, 1, 1]} : vector<2x16x20xf32> to vector<2x16x16xf32>
    %258 = vector.broadcast %256 : f32 to vector<2x16x16xf32>
    %259 = arith.mulf %258, %257 : vector<2x16x16xf32>
    %260 = arith.addf %255, %259 : vector<2x16x16xf32>
    %c44 = arith.constant 44 : index
    %261 = memref.load %arg2[%c44] : memref<50xf32, #tpu.memory_space<smem>>
    %262 = vector.extract_strided_slice %240 {offsets = [0, 0, 4], sizes = [2, 16, 16], strides = [1, 1, 1]} : vector<2x16x20xf32> to vector<2x16x16xf32>
    %263 = vector.broadcast %261 : f32 to vector<2x16x16xf32>
    %264 = arith.mulf %263, %262 : vector<2x16x16xf32>
    %265 = arith.addf %260, %264 : vector<2x16x16xf32>
    %c1_70 = arith.constant 1 : index
    %c0_71 = arith.constant 0 : index
    %c4_72 = arith.constant 4 : index
    %c0_73 = arith.constant 0 : index
    %266 = vector.load %arg5[%c1_70, %c0_71, %c4_72, %c0_73] : memref<2x2x20x20xf32, #tpu.memory_space<vmem>>, vector<1x2x16x20xf32>
    %267 = vector.shape_cast %266 : vector<1x2x16x20xf32> to vector<2x16x20xf32>
    %c45 = arith.constant 45 : index
    %268 = memref.load %arg2[%c45] : memref<50xf32, #tpu.memory_space<smem>>
    %269 = vector.extract_strided_slice %267 {offsets = [0, 0, 0], sizes = [2, 16, 16], strides = [1, 1, 1]} : vector<2x16x20xf32> to vector<2x16x16xf32>
    %270 = vector.broadcast %268 : f32 to vector<2x16x16xf32>
    %271 = arith.mulf %270, %269 : vector<2x16x16xf32>
    %272 = arith.addf %265, %271 : vector<2x16x16xf32>
    %c46 = arith.constant 46 : index
    %273 = memref.load %arg2[%c46] : memref<50xf32, #tpu.memory_space<smem>>
    %274 = vector.extract_strided_slice %267 {offsets = [0, 0, 1], sizes = [2, 16, 16], strides = [1, 1, 1]} : vector<2x16x20xf32> to vector<2x16x16xf32>
    %275 = vector.broadcast %273 : f32 to vector<2x16x16xf32>
    %276 = arith.mulf %275, %274 : vector<2x16x16xf32>
    %277 = arith.addf %272, %276 : vector<2x16x16xf32>
    %c47 = arith.constant 47 : index
    %278 = memref.load %arg2[%c47] : memref<50xf32, #tpu.memory_space<smem>>
    %279 = vector.extract_strided_slice %267 {offsets = [0, 0, 2], sizes = [2, 16, 16], strides = [1, 1, 1]} : vector<2x16x20xf32> to vector<2x16x16xf32>
    %280 = vector.broadcast %278 : f32 to vector<2x16x16xf32>
    %281 = arith.mulf %280, %279 : vector<2x16x16xf32>
    %282 = arith.addf %277, %281 : vector<2x16x16xf32>
    %c48 = arith.constant 48 : index
    %283 = memref.load %arg2[%c48] : memref<50xf32, #tpu.memory_space<smem>>
    %284 = vector.extract_strided_slice %267 {offsets = [0, 0, 3], sizes = [2, 16, 16], strides = [1, 1, 1]} : vector<2x16x20xf32> to vector<2x16x16xf32>
    %285 = vector.broadcast %283 : f32 to vector<2x16x16xf32>
    %286 = arith.mulf %285, %284 : vector<2x16x16xf32>
    %287 = arith.addf %282, %286 : vector<2x16x16xf32>
    %c49 = arith.constant 49 : index
    %288 = memref.load %arg2[%c49] : memref<50xf32, #tpu.memory_space<smem>>
    %289 = vector.extract_strided_slice %267 {offsets = [0, 0, 4], sizes = [2, 16, 16], strides = [1, 1, 1]} : vector<2x16x20xf32> to vector<2x16x16xf32>
    %290 = vector.broadcast %288 : f32 to vector<2x16x16xf32>
    %291 = arith.mulf %290, %289 : vector<2x16x16xf32>
    %292 = arith.addf %287, %291 : vector<2x16x16xf32>
    %cst_74 = arith.constant 0.000000e+00 : f32
    %293 = vector.broadcast %cst_74 : f32 to vector<2x16x16xf32>
    %294 = arith.maximumf %292, %293 : vector<2x16x16xf32>
    %cst_75 = arith.constant 0.000000e+00 : f32
    %295 = vector.broadcast %cst_75 : f32 to vector<2x16x16xf32>
    %296 = arith.subf %295, %294 : vector<2x16x16xf32>
    %297 = math.exp %296 : vector<2x16x16xf32>
    %cst_76 = arith.constant 1.000000e+00 : f32
    %298 = vector.broadcast %cst_76 : f32 to vector<2x16x16xf32>
    %299 = arith.addf %298, %297 : vector<2x16x16xf32>
    %cst_77 = arith.constant 1.000000e+00 : f32
    %300 = vector.broadcast %cst_77 : f32 to vector<2x16x16xf32>
    %301 = arith.divf %300, %299 : vector<2x16x16xf32>
    %302 = vector.shape_cast %301 : vector<2x16x16xf32> to vector<2x1x256xf32>
    %c0_78 = arith.constant 0 : index
    %c0_79 = arith.constant 0 : index
    %c0_80 = arith.constant 0 : index
    %303 = vector.load %arg1[%c0_78, %c0_79, %c0_80] : memref<2x4x256xf32, #tpu.memory_space<vmem>>, vector<2x4x256xf32>
    %304 = vector.broadcast %302 : vector<2x1x256xf32> to vector<2x4x256xf32>
    %305 = arith.mulf %304, %303 : vector<2x4x256xf32>
    %c0_81 = arith.constant 0 : index
    %c0_82 = arith.constant 0 : index
    %c0_83 = arith.constant 0 : index
    %306 = vector.load %arg4[%c0_81, %c0_82, %c0_83] : memref<2x4x256xf32, #tpu.memory_space<vmem>>, vector<2x4x256xf32>
    tpu.vector_store %arg4[%c0_81, %c0_82, %c0_83], %305 {strides = array<i32>} : memref<2x4x256xf32, #tpu.memory_space<vmem>>, vector<2x4x256xf32>,
    return
  }
  func.func @transform_0(%arg0: i32) -> (i32, i32, i32) {
    %c0_i32 = arith.constant 0 : i32
    %c0_i32_0 = arith.constant 0 : i32
    %c0_i32_1 = arith.constant 0 : i32
    return %arg0, %c0_i32, %c0_i32_0 : i32, i32, i32
  }
  func.func @transform_1(%arg0: i32) -> i32 {
    %c0_i32 = arith.constant 0 : i32
    %c0_i32_0 = arith.constant 0 : i32
    return %c0_i32 : i32
  }
  func.func @transform_2(%arg0: i32) -> i32 {
    %c0_i32 = arith.constant 0 : i32
    %c0_i32_0 = arith.constant 0 : i32
    return %c0_i32 : i32
  }
  func.func @transform_3(%arg0: i32) -> (i32, i32, i32) {
    %c0_i32 = arith.constant 0 : i32
    %c0_i32_0 = arith.constant 0 : i32
    %c0_i32_1 = arith.constant 0 : i32
    return %arg0, %c0_i32, %c0_i32_0 : i32, i32, i32
  }
}

</mosaic_0001>

<llo_original>
// kernel: spatial_attention_forward.1
$region0: #{spatial_attention_forward.1}
  #allocation0 [shape = 'u32[]', space=smem, size = 0x4, offset = 0x4, fixed_abs, tag = 'smem constant byte address 0x4 - core index']
  #allocation1 [shape = 'u32[144,128]{1,0:T(1,128)}', space=vmem, size = 0x12000, scoped, tag = 'internal scratch']
  #allocation2 [shape = 'f32[2,2,20,20]{3,2,1,0:T(8,128)}', space=vmem, size = 0xc000, scoped, tag = 'scratch operand']
  #allocation3 [shape = 'f32[1]{0:T(128)S(6)}', space=smem, size = 0x200, scoped, tag = 'scoped memory for spatial_attention_forward.1']
  %s0 = inlined_call_operand.vmem [shape: f32[2,4,256], index: 0, kind: input, shape index: {}]
  %s1 = inlined_call_operand.vmem [shape: f32[50], index: 1, kind: input, shape index: {}]
  %s2 = inlined_call_operand.<no memory space> [shape: f32[1], index: 2, kind: input, shape index: {}]
  %s3 = inlined_call_operand.vmem [shape: f32[2,4,256], index: 3, kind: output, shape index: {}]
  %s4 = sld [smem:[#allocation0]]
  $region26: #{spatial_attention_forward.1} parent=0
    _
  %s6 = ssub.s32 1, %s4
  %s7 = scalar_select 0, %s6, %s4
  %8 = sst [smem:[#allocation3]] %s2
  $region1: #{spatial_attention_forward.1} parent=0
    #allocation4 [shape = 'u8[512]{0}', space=smem, size = 0x200, scoped, tag = 'input window, operand 1, single buffered']
    #allocation5 [shape = 's32[1]{0}', space=sflag, size = 0x4, scoped, tag = 'scoped memory for spatial_attention_forward.1']
    %9 = vsyncpa [#allocation5], 0
    // Predicated region
    $region2: #{spatial_attention_forward.1} parent=1 // pred_check
      _
    $region3: #{spatial_attention_forward.1} parent=1 // pred_check_branch
      %11 = sbr.rel (0) target = $region5
    $region4: #{spatial_attention_forward.1} parent=1 // pred_region
      _
    $region5: #{spatial_attention_forward.1} parent=1 // pred_fallthru
      _
    // Predicated region
    $region6: #{spatial_attention_forward.1} parent=1 // pred_check
      _
    $region7: #{spatial_attention_forward.1} parent=1 // pred_check_branch
      %13 = sbr.rel (0) target = $region9
    $region8: #{spatial_attention_forward.1} parent=1 // pred_region
      %s15 = ssub.s32 16, 16
      %16 = vsyncadd [#allocation5], %s15
      %s18 = sshll.u32 %s1, 4
      %s19 = int_to_ptr.vmem [resolvable:$true] %s18
      %21 = dma.vmem_to_smem %s19, 16, [#allocation4], [#allocation5]
    $region9: #{spatial_attention_forward.1} parent=1 // pred_fallthru
      _
    // Predicated region
    $region10: #{spatial_attention_forward.1} parent=1 // pred_check
      _
    $region11: #{spatial_attention_forward.1} parent=1 // pred_check_branch
      %23 = sbr.rel (0) target = $region13
    $region12: #{spatial_attention_forward.1} parent=1 // pred_region
      _
    $region13: #{spatial_attention_forward.1} parent=1 // pred_fallthru
      _
    // Predicated region
    $region14: #{spatial_attention_forward.1} parent=1 // pred_check
      _
    $region15: #{spatial_attention_forward.1} parent=1 // pred_check_branch
      %25 = sbr.rel (0) target = $region17
    $region16: #{spatial_attention_forward.1} parent=1 // pred_region
      %26 = dma.done [#allocation5], 16
    $region17: #{spatial_attention_forward.1} parent=1 // pred_fallthru
      _
    %27 = sfence
    %vm28 = vcmask 156672
    %29 = vst.msk [vmem:[#allocation2] sm:$0x3] %vm28, 0.0
    %30 = vst.msk [vmem:[#allocation2 + $0x18] sm:$0x3] %vm28, 0.0
    %31 = vst.msk [vmem:[#allocation2 + $0x30] sm:$0x3] %vm28, 0.0
    %32 = vst.msk [vmem:[#allocation2 + $0x48] sm:$0x3] %vm28, 0.0
    %33 = vst.msk [vmem:[#allocation2 + $0x12] sm:$0x3] %vm28, 0.0
    %34 = vst.msk [vmem:[#allocation2 + $0x2a] sm:$0x3] %vm28, 0.0
    %35 = vst.msk [vmem:[#allocation2 + $0x42] sm:$0x3] %vm28, 0.0
    %36 = vst.msk [vmem:[#allocation2 + $0x5a] sm:$0x3] %vm28, 0.0
    %vm37 = vcmask 15360
    %38 = vst.msk [vmem:[#allocation2] sm:$0xff] %vm37, 0.0
    %39 = vst.msk [vmem:[#allocation2 + $0x8] sm:$0xff] %vm37, 0.0
    %vm40 = vcmask 11264
    %41 = vst.msk [vmem:[#allocation2 + $0x10] sm:$0xf] %vm40, 0.0
    %42 = vst.msk [vmem:[#allocation2 + $0x18] sm:$0xff] %vm37, 0.0
    %43 = vst.msk [vmem:[#allocation2 + $0x20] sm:$0xff] %vm37, 0.0
    %44 = vst.msk [vmem:[#allocation2 + $0x28] sm:$0xf] %vm40, 0.0
    %45 = vst.msk [vmem:[#allocation2 + $0x30] sm:$0xff] %vm37, 0.0
    %46 = vst.msk [vmem:[#allocation2 + $0x38] sm:$0xff] %vm37, 0.0
    %47 = vst.msk [vmem:[#allocation2 + $0x40] sm:$0xf] %vm40, 0.0
    %48 = vst.msk [vmem:[#allocation2 + $0x48] sm:$0xff] %vm37, 0.0
    %49 = vst.msk [vmem:[#allocation2 + $0x50] sm:$0xff] %vm37, 0.0
    %50 = vst.msk [vmem:[#allocation2 + $0x58] sm:$0xf] %vm40, 0.0
    %vm51 = vcmask 162960
    %52 = vst.msk [vmem:[#allocation2] sm:$0xff] %vm51, 0.0
    %53 = vst.msk [vmem:[#allocation2 + $0x8] sm:$0xff] %vm51, 0.0
    %vm54 = vcmask 158864
    %55 = vst.msk [vmem:[#allocation2 + $0x10] sm:$0xf] %vm54, 0.0
    %56 = vst.msk [vmem:[#allocation2 + $0x18] sm:$0xff] %vm51, 0.0
    %57 = vst.msk [vmem:[#allocation2 + $0x20] sm:$0xff] %vm51, 0.0
    %58 = vst.msk [vmem:[#allocation2 + $0x28] sm:$0xf] %vm54, 0.0
    %59 = vst.msk [vmem:[#allocation2 + $0x30] sm:$0xff] %vm51, 0.0
    %60 = vst.msk [vmem:[#allocation2 + $0x38] sm:$0xff] %vm51, 0.0
    %61 = vst.msk [vmem:[#allocation2 + $0x40] sm:$0xf] %vm54, 0.0
    %62 = vst.msk [vmem:[#allocation2 + $0x48] sm:$0xff] %vm51, 0.0
    %63 = vst.msk [vmem:[#allocation2 + $0x50] sm:$0xff] %vm51, 0.0
    %64 = vst.msk [vmem:[#allocation2 + $0x58] sm:$0xf] %vm54, 0.0
    %v65 = vld [vmem:[%s0] sm:$0xff]
    %v66 = vld [vmem:[%s0 + $0x8] sm:$0xff]
    %v69 = vcombine.high %v65, %v65
    %v70 = vcombine.high %v66, %v66
    %vm73 = vcmask 1043456
    %v74 = vsel %vm73, %v65, 0.0
    %v75 = vrot.slane %v74, 4
    %v76 = vadd.f32 %v74, %v75
    %v77 = vrot.slane %v76, 2
    %v78 = vadd.f32 %v76, %v77
    %v79 = vrot.slane %v78, 1
    %v80 = vadd.f32 %v78, %v79
    %v81 = vsel %vm73, %v69, 0.0
    %v82 = vrot.slane %v81, 4
    %v83 = vadd.f32 %v81, %v82
    %v84 = vrot.slane %v83, 2
    %v85 = vadd.f32 %v83, %v84
    %v86 = vrot.slane %v85, 1
    %v87 = vadd.f32 %v85, %v86
    %v88 = vsel %vm73, %v66, 0.0
    %v89 = vrot.slane %v88, 4
    %v90 = vadd.f32 %v88, %v89
    %v91 = vrot.slane %v90, 2
    %v92 = vadd.f32 %v90, %v91
    %v93 = vrot.slane %v92, 1
    %v94 = vadd.f32 %v92, %v93
    %v95 = vsel %vm73, %v70, 0.0
    %v96 = vrot.slane %v95, 4
    %v97 = vadd.f32 %v95, %v96
    %v98 = vrot.slane %v97, 2
    %v99 = vadd.f32 %v97, %v98
    %v100 = vrot.slane %v99, 1
    %v101 = vadd.f32 %v99, %v100
    %v102 = vrcp.pop 4.0
    %v103 = vmul.f32 %v80, %v102
    %v104 = vmul.f32 %v87, %v102
    %v105 = vmul.f32 %v94, %v102
    %v106 = vmul.f32 %v101, %v102
    %v107 = vsel %vm73, %v65, -inf
    %v108 = vrot.slane %v107, 4
    %v109 = vmax.f32 %v107, %v108
    %v110 = vrot.slane %v109, 2
    %v111 = vmax.f32 %v109, %v110
    %v112 = vrot.slane %v111, 1
    %v113 = vmax.f32 %v111, %v112
    %v114 = vsel %vm73, %v69, -inf
    %v115 = vrot.slane %v114, 4
    %v116 = vmax.f32 %v114, %v115
    %v117 = vrot.slane %v116, 2
    %v118 = vmax.f32 %v116, %v117
    %v119 = vrot.slane %v118, 1
    %v120 = vmax.f32 %v118, %v119
    %v121 = vsel %vm73, %v66, -inf
    %v122 = vrot.slane %v121, 4
    %v123 = vmax.f32 %v121, %v122
    %v124 = vrot.slane %v123, 2
    %v125 = vmax.f32 %v123, %v124
    %v126 = vrot.slane %v125, 1
    %v127 = vmax.f32 %v125, %v126
    %v128 = vsel %vm73, %v70, -inf
    %v129 = vrot.slane %v128, 4
    %v130 = vmax.f32 %v128, %v129
    %v131 = vrot.slane %v130, 2
    %v132 = vmax.f32 %v130, %v131
    %v133 = vrot.slane %v132, 1
    %v134 = vmax.f32 %v132, %v133
    %137 = vrot.lane.b32.xlu0 %v103, 112
    %v138 = vpop.permute.xlu0 %137
    %139 = vrot.lane.b32.xlu0 %v105, 112
    %v140 = vpop.permute.xlu0 %139
    %141 = vrot.lane.b32.xlu0 %v103, 96
    %v142 = vpop.permute.xlu0 %141
    %143 = vrot.lane.b32.xlu0 %v105, 96
    %v144 = vpop.permute.xlu0 %143
    %145 = vrot.lane.b32.xlu0 %v103, 80
    %v146 = vpop.permute.xlu0 %145
    %147 = vrot.lane.b32.xlu0 %v105, 80
    %v148 = vpop.permute.xlu0 %147
    %149 = vrot.lane.b32.xlu0 %v103, 64
    %v150 = vpop.permute.xlu0 %149
    %151 = vrot.lane.b32.xlu0 %v105, 64
    %v152 = vpop.permute.xlu0 %151
    %153 = vrot.lane.b32.xlu0 %v103, 48
    %v154 = vpop.permute.xlu0 %153
    %155 = vrot.lane.b32.xlu0 %v105, 48
    %v156 = vpop.permute.xlu0 %155
    %157 = vrot.lane.b32.xlu0 %v103, 32
    %v158 = vpop.permute.xlu0 %157
    %159 = vrot.lane.b32.xlu0 %v105, 32
    %v160 = vpop.permute.xlu0 %159
    %161 = vrot.lane.b32.xlu0 %v103, 16
    %v162 = vpop.permute.xlu0 %161
    %163 = vrot.lane.b32.xlu0 %v105, 16
    %v164 = vpop.permute.xlu0 %163
    %167 = vrot.lane.b32.xlu0 %v104, 112
    %v168 = vpop.permute.xlu0 %167
    %169 = vrot.lane.b32.xlu0 %v106, 112
    %v170 = vpop.permute.xlu0 %169
    %171 = vrot.lane.b32.xlu0 %v104, 96
    %v172 = vpop.permute.xlu0 %171
    %173 = vrot.lane.b32.xlu0 %v106, 96
    %v174 = vpop.permute.xlu0 %173
    %175 = vrot.lane.b32.xlu0 %v104, 80
    %v176 = vpop.permute.xlu0 %175
    %177 = vrot.lane.b32.xlu0 %v106, 80
    %v178 = vpop.permute.xlu0 %177
    %179 = vrot.lane.b32.xlu0 %v104, 64
    %v180 = vpop.permute.xlu0 %179
    %181 = vrot.lane.b32.xlu0 %v106, 64
    %v182 = vpop.permute.xlu0 %181
    %183 = vrot.lane.b32.xlu0 %v104, 48
    %v184 = vpop.permute.xlu0 %183
    %185 = vrot.lane.b32.xlu0 %v106, 48
    %v186 = vpop.permute.xlu0 %185
    %187 = vrot.lane.b32.xlu0 %v104, 32
    %v188 = vpop.permute.xlu0 %187
    %189 = vrot.lane.b32.xlu0 %v106, 32
    %v190 = vpop.permute.xlu0 %189
    %191 = vrot.lane.b32.xlu0 %v104, 16
    %v192 = vpop.permute.xlu0 %191
    %193 = vrot.lane.b32.xlu0 %v106, 16
    %v194 = vpop.permute.xlu0 %193
    %v195 = vrot.slane %v105, 7
    %vm196 = vcmask 1041409
    %v197 = vsel %vm196, %v195, %v103
    %v198 = vrot.slane %v140, 7
    %v199 = vsel %vm196, %v198, %v138
    %v200 = vrot.slane %v144, 7
    %v201 = vsel %vm196, %v200, %v142
    %v202 = vrot.slane %v148, 7
    %v203 = vsel %vm196, %v202, %v146
    %v204 = vrot.slane %v152, 7
    %v205 = vsel %vm196, %v204, %v150
    %v206 = vrot.slane %v156, 7
    %v207 = vsel %vm196, %v206, %v154
    %v208 = vrot.slane %v160, 7
    %v209 = vsel %vm196, %v208, %v158
    %v210 = vrot.slane %v164, 7
    %v211 = vsel %vm196, %v210, %v162
    %v212 = vrot.slane %v106, 7
    %v213 = vsel %vm196, %v212, %v104
    %v214 = vrot.slane %v170, 7
    %v215 = vsel %vm196, %v214, %v168
    %v216 = vrot.slane %v174, 7
    %v217 = vsel %vm196, %v216, %v172
    %v218 = vrot.slane %v178, 7
    %v219 = vsel %vm196, %v218, %v176
    %v220 = vrot.slane %v182, 7
    %v221 = vsel %vm196, %v220, %v180
    %v222 = vrot.slane %v186, 7
    %v223 = vsel %vm196, %v222, %v184
    %v224 = vrot.slane %v190, 7
    %v225 = vsel %vm196, %v224, %v188
    %v226 = vrot.slane %v194, 7
    %v227 = vsel %vm196, %v226, %v192
    %v244 = vcombine.low %v197, %v201
    %v246 = vunpack.c.l.s4 1983009808
    %v247 = vunpack.c.0.s8 %v246
    %v248 = vlaneseq
    %v249 = vshrl.u32 %v248, 7
    %v250 = vsub.s32 %v247, %v249
    %v251 = vrot.slane %v244, %v250
    %v252 = vcombine.low %v199, %v203
    %v254 = vunpack.c.l.s4 1983009808
    %v255 = vunpack.c.0.s8 %v254
    %v256 = vlaneseq
    %v257 = vshrl.u32 %v256, 7
    %v258 = vsub.s32 %v255, %v257
    %v259 = vrot.slane %v252, %v258
    %v260 = vcombine.low %v205, %v209
    %v262 = vunpack.c.l.s4 1983009808
    %v263 = vunpack.c.0.s8 %v262
    %v264 = vlaneseq
    %v265 = vshrl.u32 %v264, 7
    %v266 = vsub.s32 %v263, %v265
    %v267 = vrot.slane %v260, %v266
    %v268 = vcombine.low %v207, %v211
    %v270 = vunpack.c.l.s4 1983009808
    %v271 = vunpack.c.0.s8 %v270
    %v272 = vlaneseq
    %v273 = vshrl.u32 %v272, 7
    %v274 = vsub.s32 %v271, %v273
    %v275 = vrot.slane %v268, %v274
    %v276 = vcombine.low %v251, %v259
    %v278 = vunpack.c.l.s4 1934713408
    %v279 = vunpack.c.0.s8 %v278
    %v280 = vlaneseq
    %v281 = vshrl.u32 %v280, 7
    %v282 = vsub.s32 %v279, %v281
    %v283 = vrot.slane %v276, %v282
    %v284 = vcombine.low %v267, %v275
    %v286 = vunpack.c.l.s4 1934713408
    %v287 = vunpack.c.0.s8 %v286
    %v288 = vlaneseq
    %v289 = vshrl.u32 %v288, 7
    %v290 = vsub.s32 %v287, %v289
    %v291 = vrot.slane %v284, %v290
    %v292 = vcombine.low %v283, %v291
    %v293 = vcombine.high %v283, %v291
    %v294 = vcombine.low %v213, %v217
    %v296 = vunpack.c.l.s4 1983009808
    %v297 = vunpack.c.0.s8 %v296
    %v298 = vlaneseq
    %v299 = vshrl.u32 %v298, 7
    %v300 = vsub.s32 %v297, %v299
    %v301 = vrot.slane %v294, %v300
    %v302 = vcombine.low %v215, %v219
    %v304 = vunpack.c.l.s4 1983009808
    %v305 = vunpack.c.0.s8 %v304
    %v306 = vlaneseq
    %v307 = vshrl.u32 %v306, 7
    %v308 = vsub.s32 %v305, %v307
    %v309 = vrot.slane %v302, %v308
    %v310 = vcombine.low %v221, %v225
    %v312 = vunpack.c.l.s4 1983009808
    %v313 = vunpack.c.0.s8 %v312
    %v314 = vlaneseq
    %v315 = vshrl.u32 %v314, 7
    %v316 = vsub.s32 %v313, %v315
    %v317 = vrot.slane %v310, %v316
    %v318 = vcombine.low %v223, %v227
    %v320 = vunpack.c.l.s4 1983009808
    %v321 = vunpack.c.0.s8 %v320
    %v322 = vlaneseq
    %v323 = vshrl.u32 %v322, 7
    %v324 = vsub.s32 %v321, %v323
    %v325 = vrot.slane %v318, %v324
    %v326 = vcombine.low %v301, %v309
    %v328 = vunpack.c.l.s4 1934713408
    %v329 = vunpack.c.0.s8 %v328
    %v330 = vlaneseq
    %v331 = vshrl.u32 %v330, 7
    %v332 = vsub.s32 %v329, %v331
    %v333 = vrot.slane %v326, %v332
    %v334 = vcombine.low %v317, %v325
    %v336 = vunpack.c.l.s4 1934713408
    %v337 = vunpack.c.0.s8 %v336
    %v338 = vlaneseq
    %v339 = vshrl.u32 %v338, 7
    %v340 = vsub.s32 %v337, %v339
    %v341 = vrot.slane %v334, %v340
    %v342 = vcombine.low %v333, %v341
    %v343 = vcombine.high %v333, %v341
    %348 = vrot.lane.b32.xlu0 %v292, 2
    %v349 = vpop.permute.xlu0 %348
    %350 = vrot.lane.b32.xlu0 %v342, 2
    %v351 = vpop.permute.xlu0 %350
    %352 = vrot.lane.b32.xlu0 %v293, 2
    %v353 = vpop.permute.xlu0 %352
    %354 = vrot.lane.b32.xlu0 %v343, 2
    %v355 = vpop.permute.xlu0 %354
    %vm360 = vcmask 146448
    %361 = vst.msk [vmem:[#allocation2 + $0x2] sm:$0xff] %vm360, %v349
    %362 = vst.msk [vmem:[#allocation2 + $0xa] sm:$0xff] %vm360, %v351
    %363 = vst.msk [vmem:[#allocation2 + $0x1a] sm:$0xff] %vm360, %v353
    %364 = vst.msk [vmem:[#allocation2 + $0x22] sm:$0xff] %vm360, %v355
    %367 = vrot.lane.b32.xlu0 %v113, 112
    %v368 = vpop.permute.xlu0 %367
    %369 = vrot.lane.b32.xlu0 %v127, 112
    %v370 = vpop.permute.xlu0 %369
    %371 = vrot.lane.b32.xlu0 %v113, 96
    %v372 = vpop.permute.xlu0 %371
    %373 = vrot.lane.b32.xlu0 %v127, 96
    %v374 = vpop.permute.xlu0 %373
    %375 = vrot.lane.b32.xlu0 %v113, 80
    %v376 = vpop.permute.xlu0 %375
    %377 = vrot.lane.b32.xlu0 %v127, 80
    %v378 = vpop.permute.xlu0 %377
    %379 = vrot.lane.b32.xlu0 %v113, 64
    %v380 = vpop.permute.xlu0 %379
    %381 = vrot.lane.b32.xlu0 %v127, 64
    %v382 = vpop.permute.xlu0 %381
    %383 = vrot.lane.b32.xlu0 %v113, 48
    %v384 = vpop.permute.xlu0 %383
    %385 = vrot.lane.b32.xlu0 %v127, 48
    %v386 = vpop.permute.xlu0 %385
    %387 = vrot.lane.b32.xlu0 %v113, 32
    %v388 = vpop.permute.xlu0 %387
    %389 = vrot.lane.b32.xlu0 %v127, 32
    %v390 = vpop.permute.xlu0 %389
    %391 = vrot.lane.b32.xlu0 %v113, 16
    %v392 = vpop.permute.xlu0 %391
    %393 = vrot.lane.b32.xlu0 %v127, 16
    %v394 = vpop.permute.xlu0 %393
    %397 = vrot.lane.b32.xlu0 %v120, 112
    %v398 = vpop.permute.xlu0 %397
    %399 = vrot.lane.b32.xlu0 %v134, 112
    %v400 = vpop.permute.xlu0 %399
    %401 = vrot.lane.b32.xlu0 %v120, 96
    %v402 = vpop.permute.xlu0 %401
    %403 = vrot.lane.b32.xlu0 %v134, 96
    %v404 = vpop.permute.xlu0 %403
    %405 = vrot.lane.b32.xlu0 %v120, 80
    %v406 = vpop.permute.xlu0 %405
    %407 = vrot.lane.b32.xlu0 %v134, 80
    %v408 = vpop.permute.xlu0 %407
    %409 = vrot.lane.b32.xlu0 %v120, 64
    %v410 = vpop.permute.xlu0 %409
    %411 = vrot.lane.b32.xlu0 %v134, 64
    %v412 = vpop.permute.xlu0 %411
    %413 = vrot.lane.b32.xlu0 %v120, 48
    %v414 = vpop.permute.xlu0 %413
    %415 = vrot.lane.b32.xlu0 %v134, 48
    %v416 = vpop.permute.xlu0 %415
    %417 = vrot.lane.b32.xlu0 %v120, 32
    %v418 = vpop.permute.xlu0 %417
    %419 = vrot.lane.b32.xlu0 %v134, 32
    %v420 = vpop.permute.xlu0 %419
    %421 = vrot.lane.b32.xlu0 %v120, 16
    %v422 = vpop.permute.xlu0 %421
    %423 = vrot.lane.b32.xlu0 %v134, 16
    %v424 = vpop.permute.xlu0 %423
    %v425 = vrot.slane %v127, 7
    %v426 = vsel %vm196, %v425, %v113
    %v427 = vrot.slane %v370, 7
    %v428 = vsel %vm196, %v427, %v368
    %v429 = vrot.slane %v374, 7
    %v430 = vsel %vm196, %v429, %v372
    %v431 = vrot.slane %v378, 7
    %v432 = vsel %vm196, %v431, %v376
    %v433 = vrot.slane %v382, 7
    %v434 = vsel %vm196, %v433, %v380
    %v435 = vrot.slane %v386, 7
    %v436 = vsel %vm196, %v435, %v384
    %v437 = vrot.slane %v390, 7
    %v438 = vsel %vm196, %v437, %v388
    %v439 = vrot.slane %v394, 7
    %v440 = vsel %vm196, %v439, %v392
    %v441 = vrot.slane %v134, 7
    %v442 = vsel %vm196, %v441, %v120
    %v443 = vrot.slane %v400, 7
    %v444 = vsel %vm196, %v443, %v398
    %v445 = vrot.slane %v404, 7
    %v446 = vsel %vm196, %v445, %v402
    %v447 = vrot.slane %v408, 7
    %v448 = vsel %vm196, %v447, %v406
    %v449 = vrot.slane %v412, 7
    %v450 = vsel %vm196, %v449, %v410
    %v451 = vrot.slane %v416, 7
    %v452 = vsel %vm196, %v451, %v414
    %v453 = vrot.slane %v420, 7
    %v454 = vsel %vm196, %v453, %v418
    %v455 = vrot.slane %v424, 7
    %v456 = vsel %vm196, %v455, %v422
    %v473 = vcombine.low %v426, %v430
    %v475 = vunpack.c.l.s4 1983009808
    %v476 = vunpack.c.0.s8 %v475
    %v477 = vlaneseq
    %v478 = vshrl.u32 %v477, 7
    %v479 = vsub.s32 %v476, %v478
    %v480 = vrot.slane %v473, %v479
    %v481 = vcombine.low %v428, %v432
    %v483 = vunpack.c.l.s4 1983009808
    %v484 = vunpack.c.0.s8 %v483
    %v485 = vlaneseq
    %v486 = vshrl.u32 %v485, 7
    %v487 = vsub.s32 %v484, %v486
    %v488 = vrot.slane %v481, %v487
    %v489 = vcombine.low %v434, %v438
    %v491 = vunpack.c.l.s4 1983009808
    %v492 = vunpack.c.0.s8 %v491
    %v493 = vlaneseq
    %v494 = vshrl.u32 %v493, 7
    %v495 = vsub.s32 %v492, %v494
    %v496 = vrot.slane %v489, %v495
    %v497 = vcombine.low %v436, %v440
    %v499 = vunpack.c.l.s4 1983009808
    %v500 = vunpack.c.0.s8 %v499
    %v501 = vlaneseq
    %v502 = vshrl.u32 %v501, 7
    %v503 = vsub.s32 %v500, %v502
    %v504 = vrot.slane %v497, %v503
    %v505 = vcombine.low %v480, %v488
    %v507 = vunpack.c.l.s4 1934713408
    %v508 = vunpack.c.0.s8 %v507
    %v509 = vlaneseq
    %v510 = vshrl.u32 %v509, 7
    %v511 = vsub.s32 %v508, %v510
    %v512 = vrot.slane %v505, %v511
    %v513 = vcombine.low %v496, %v504
    %v515 = vunpack.c.l.s4 1934713408
    %v516 = vunpack.c.0.s8 %v515
    %v517 = vlaneseq
    %v518 = vshrl.u32 %v517, 7
    %v519 = vsub.s32 %v516, %v518
    %v520 = vrot.slane %v513, %v519
    %v521 = vcombine.low %v512, %v520
    %v522 = vcombine.high %v512, %v520
    %v523 = vcombine.low %v442, %v446
    %v525 = vunpack.c.l.s4 1983009808
    %v526 = vunpack.c.0.s8 %v525
    %v527 = vlaneseq
    %v528 = vshrl.u32 %v527, 7
    %v529 = vsub.s32 %v526, %v528
    %v530 = vrot.slane %v523, %v529
    %v531 = vcombine.low %v444, %v448
    %v533 = vunpack.c.l.s4 1983009808
    %v534 = vunpack.c.0.s8 %v533
    %v535 = vlaneseq
    %v536 = vshrl.u32 %v535, 7
    %v537 = vsub.s32 %v534, %v536
    %v538 = vrot.slane %v531, %v537
    %v539 = vcombine.low %v450, %v454
    %v541 = vunpack.c.l.s4 1983009808
    %v542 = vunpack.c.0.s8 %v541
    %v543 = vlaneseq
    %v544 = vshrl.u32 %v543, 7
    %v545 = vsub.s32 %v542, %v544
    %v546 = vrot.slane %v539, %v545
    %v547 = vcombine.low %v452, %v456
    %v549 = vunpack.c.l.s4 1983009808
    %v550 = vunpack.c.0.s8 %v549
    %v551 = vlaneseq
    %v552 = vshrl.u32 %v551, 7
    %v553 = vsub.s32 %v550, %v552
    %v554 = vrot.slane %v547, %v553
    %v555 = vcombine.low %v530, %v538
    %v557 = vunpack.c.l.s4 1934713408
    %v558 = vunpack.c.0.s8 %v557
    %v559 = vlaneseq
    %v560 = vshrl.u32 %v559, 7
    %v561 = vsub.s32 %v558, %v560
    %v562 = vrot.slane %v555, %v561
    %v563 = vcombine.low %v546, %v554
    %v565 = vunpack.c.l.s4 1934713408
    %v566 = vunpack.c.0.s8 %v565
    %v567 = vlaneseq
    %v568 = vshrl.u32 %v567, 7
    %v569 = vsub.s32 %v566, %v568
    %v570 = vrot.slane %v563, %v569
    %v571 = vcombine.low %v562, %v570
    %v572 = vcombine.high %v562, %v570
    %577 = vrot.lane.b32.xlu0 %v521, 2
    %v578 = vpop.permute.xlu0 %577
    %579 = vrot.lane.b32.xlu0 %v571, 2
    %v580 = vpop.permute.xlu0 %579
    %581 = vrot.lane.b32.xlu0 %v522, 2
    %v582 = vpop.permute.xlu0 %581
    %583 = vrot.lane.b32.xlu0 %v572, 2
    %v584 = vpop.permute.xlu0 %583
    %s589 = scalar_lea.vmem [#allocation2], 48
    %590 = vst.msk [vmem:[%s589 + $0x2] sm:$0xff] %vm360, %v578
    %591 = vst.msk [vmem:[%s589 + $0xa] sm:$0xff] %vm360, %v580
    %592 = vst.msk [vmem:[%s589 + $0x1a] sm:$0xff] %vm360, %v582
    %593 = vst.msk [vmem:[%s589 + $0x22] sm:$0xff] %vm360, %v584
    %s594 = sld [smem:[#allocation3]]
    %v595 = vstv %s594
    %v596 = vld [vmem:[#allocation2] sm:$0xff]
    %v597 = vld [vmem:[#allocation2 + $0x8] sm:$0xff]
    %v598 = vld [vmem:[#allocation2 + $0x18] sm:$0xff]
    %v599 = vld [vmem:[#allocation2 + $0x20] sm:$0xff]
    %s600 = sld [smem:[#allocation4]]
    %v601 = vstv %s600
    %v602 = vmul.f32 %v601, %v596
    %v603 = vmul.f32 %v601, %v597
    %v604 = vmul.f32 %v601, %v598
    %v605 = vmul.f32 %v601, %v599
    %v606 = vadd.f32 %v595, %v602
    %v607 = vadd.f32 %v595, %v603
    %v608 = vadd.f32 %v595, %v604
    %v609 = vadd.f32 %v595, %v605
    %s610 = sld [smem:[#allocation4 + $0x1]]
    %v611 = vstv %s610
    %v612 = vmul.f32 %v611, %v596
    %v613 = vmul.f32 %v611, %v597
    %v614 = vmul.f32 %v611, %v598
    %v615 = vmul.f32 %v611, %v599
    %620 = vrot.lane.b32.xlu0 %v612, 127
    %v621 = vpop.permute.xlu0 %620
    %622 = vrot.lane.b32.xlu0 %v613, 127
    %v623 = vpop.permute.xlu0 %622
    %624 = vrot.lane.b32.xlu0 %v614, 127
    %v625 = vpop.permute.xlu0 %624
    %626 = vrot.lane.b32.xlu0 %v615, 127
    %v627 = vpop.permute.xlu0 %626
    %v632 = vadd.f32 %v606, %v621
    %v633 = vadd.f32 %v607, %v623
    %v634 = vadd.f32 %v608, %v625
    %v635 = vadd.f32 %v609, %v627
    %s636 = sld [smem:[#allocation4 + $0x2]]
    %v637 = vstv %s636
    %v638 = vmul.f32 %v637, %v596
    %v639 = vmul.f32 %v637, %v597
    %v640 = vmul.f32 %v637, %v598
    %v641 = vmul.f32 %v637, %v599
    %646 = vrot.lane.b32.xlu0 %v638, 126
    %v647 = vpop.permute.xlu0 %646
    %648 = vrot.lane.b32.xlu0 %v639, 126
    %v649 = vpop.permute.xlu0 %648
    %650 = vrot.lane.b32.xlu0 %v640, 126
    %v651 = vpop.permute.xlu0 %650
    %652 = vrot.lane.b32.xlu0 %v641, 126
    %v653 = vpop.permute.xlu0 %652
    %v658 = vadd.f32 %v632, %v647
    %v659 = vadd.f32 %v633, %v649
    %v660 = vadd.f32 %v634, %v651
    %v661 = vadd.f32 %v635, %v653
    %s662 = sld [smem:[#allocation4 + $0x3]]
    %v663 = vstv %s662
    %v664 = vmul.f32 %v663, %v596
    %v665 = vmul.f32 %v663, %v597
    %v666 = vmul.f32 %v663, %v598
    %v667 = vmul.f32 %v663, %v599
    %672 = vrot.lane.b32.xlu0 %v664, 125
    %v673 = vpop.permute.xlu0 %672
    %674 = vrot.lane.b32.xlu0 %v665, 125
    %v675 = vpop.permute.xlu0 %674
    %676 = vrot.lane.b32.xlu0 %v666, 125
    %v677 = vpop.permute.xlu0 %676
    %678 = vrot.lane.b32.xlu0 %v667, 125
    %v679 = vpop.permute.xlu0 %678
    %v684 = vadd.f32 %v658, %v673
    %v685 = vadd.f32 %v659, %v675
    %v686 = vadd.f32 %v660, %v677
    %v687 = vadd.f32 %v661, %v679
    %s688 = sld [smem:[#allocation4 + $0x4]]
    %v689 = vstv %s688
    %v690 = vmul.f32 %v689, %v596
    %v691 = vmul.f32 %v689, %v597
    %v692 = vmul.f32 %v689, %v598
    %v693 = vmul.f32 %v689, %v599
    %698 = vrot.lane.b32.xlu0 %v690, 124
    %v699 = vpop.permute.xlu0 %698
    %700 = vrot.lane.b32.xlu0 %v691, 124
    %v701 = vpop.permute.xlu0 %700
    %702 = vrot.lane.b32.xlu0 %v692, 124
    %v703 = vpop.permute.xlu0 %702
    %704 = vrot.lane.b32.xlu0 %v693, 124
    %v705 = vpop.permute.xlu0 %704
    %v710 = vadd.f32 %v684, %v699
    %v711 = vadd.f32 %v685, %v701
    %v712 = vadd.f32 %v686, %v703
    %v713 = vadd.f32 %v687, %v705
    %v714 = vld [vmem:[#allocation2 + $0x1] sm:$0xff]
    %v715 = vld [vmem:[#allocation2 + $0x9] sm:$0xff]
    %v716 = vld [vmem:[#allocation2 + $0x19] sm:$0xff]
    %v717 = vld [vmem:[#allocation2 + $0x21] sm:$0xff]
    %s718 = sld [smem:[#allocation4 + $0x5]]
    %v719 = vstv %s718
    %v720 = vmul.f32 %v719, %v714
    %v721 = vmul.f32 %v719, %v715
    %v722 = vmul.f32 %v719, %v716
    %v723 = vmul.f32 %v719, %v717
    %v724 = vadd.f32 %v710, %v720
    %v725 = vadd.f32 %v711, %v721
    %v726 = vadd.f32 %v712, %v722
    %v727 = vadd.f32 %v713, %v723
    %s728 = sld [smem:[#allocation4 + $0x6]]
    %v729 = vstv %s728
    %v730 = vmul.f32 %v729, %v714
    %v731 = vmul.f32 %v729, %v715
    %v732 = vmul.f32 %v729, %v716
    %v733 = vmul.f32 %v729, %v717
    %738 = vrot.lane.b32.xlu0 %v730, 127
    %v739 = vpop.permute.xlu0 %738
    %740 = vrot.lane.b32.xlu0 %v731, 127
    %v741 = vpop.permute.xlu0 %740
    %742 = vrot.lane.b32.xlu0 %v732, 127
    %v743 = vpop.permute.xlu0 %742
    %744 = vrot.lane.b32.xlu0 %v733, 127
    %v745 = vpop.permute.xlu0 %744
    %v750 = vadd.f32 %v724, %v739
    %v751 = vadd.f32 %v725, %v741
    %v752 = vadd.f32 %v726, %v743
    %v753 = vadd.f32 %v727, %v745
    %s754 = sld [smem:[#allocation4 + $0x7]]
    %v755 = vstv %s754
    %v756 = vmul.f32 %v755, %v714
    %v757 = vmul.f32 %v755, %v715
    %v758 = vmul.f32 %v755, %v716
    %v759 = vmul.f32 %v755, %v717
    %764 = vrot.lane.b32.xlu0 %v756, 126
    %v765 = vpop.permute.xlu0 %764
    %766 = vrot.lane.b32.xlu0 %v757, 126
    %v767 = vpop.permute.xlu0 %766
    %768 = vrot.lane.b32.xlu0 %v758, 126
    %v769 = vpop.permute.xlu0 %768
    %770 = vrot.lane.b32.xlu0 %v759, 126
    %v771 = vpop.permute.xlu0 %770
    %v776 = vadd.f32 %v750, %v765
    %v777 = vadd.f32 %v751, %v767
    %v778 = vadd.f32 %v752, %v769
    %v779 = vadd.f32 %v753, %v771
    %s780 = sld [smem:[#allocation4 + $0x8]]
    %v781 = vstv %s780
    %v782 = vmul.f32 %v781, %v714
    %v783 = vmul.f32 %v781, %v715
    %v784 = vmul.f32 %v781, %v716
    %v785 = vmul.f32 %v781, %v717
    %790 = vrot.lane.b32.xlu0 %v782, 125
    %v791 = vpop.permute.xlu0 %790
    %792 = vrot.lane.b32.xlu0 %v783, 125
    %v793 = vpop.permute.xlu0 %792
    %794 = vrot.lane.b32.xlu0 %v784, 125
    %v795 = vpop.permute.xlu0 %794
    %796 = vrot.lane.b32.xlu0 %v785, 125
    %v797 = vpop.permute.xlu0 %796
    %v802 = vadd.f32 %v776, %v791
    %v803 = vadd.f32 %v777, %v793
    %v804 = vadd.f32 %v778, %v795
    %v805 = vadd.f32 %v779, %v797
    %s806 = sld [smem:[#allocation4 + $0x9]]
    %v807 = vstv %s806
    %v808 = vmul.f32 %v807, %v714
    %v809 = vmul.f32 %v807, %v715
    %v810 = vmul.f32 %v807, %v716
    %v811 = vmul.f32 %v807, %v717
    %816 = vrot.lane.b32.xlu0 %v808, 124
    %v817 = vpop.permute.xlu0 %816
    %818 = vrot.lane.b32.xlu0 %v809, 124
    %v819 = vpop.permute.xlu0 %818
    %820 = vrot.lane.b32.xlu0 %v810, 124
    %v821 = vpop.permute.xlu0 %820
    %822 = vrot.lane.b32.xlu0 %v811, 124
    %v823 = vpop.permute.xlu0 %822
    %v828 = vadd.f32 %v802, %v817
    %v829 = vadd.f32 %v803, %v819
    %v830 = vadd.f32 %v804, %v821
    %v831 = vadd.f32 %v805, %v823
    %v832 = vld [vmem:[#allocation2 + $0x2] sm:$0xff]
    %v833 = vld [vmem:[#allocation2 + $0xa] sm:$0xff]
    %v834 = vld [vmem:[#allocation2 + $0x1a] sm:$0xff]
    %v835 = vld [vmem:[#allocation2 + $0x22] sm:$0xff]
    %s836 = sld [smem:[#allocation4 + $0xa]]
    %v837 = vstv %s836
    %v838 = vmul.f32 %v837, %v832
    %v839 = vmul.f32 %v837, %v833
    %v840 = vmul.f32 %v837, %v834
    %v841 = vmul.f32 %v837, %v835
    %v842 = vadd.f32 %v828, %v838
    %v843 = vadd.f32 %v829, %v839
    %v844 = vadd.f32 %v830, %v840
    %v845 = vadd.f32 %v831, %v841
    %s846 = sld [smem:[#allocation4 + $0xb]]
    %v847 = vstv %s846
    %v848 = vmul.f32 %v847, %v832
    %v849 = vmul.f32 %v847, %v833
    %v850 = vmul.f32 %v847, %v834
    %v851 = vmul.f32 %v847, %v835
    %856 = vrot.lane.b32.xlu0 %v848, 127
    %v857 = vpop.permute.xlu0 %856
    %858 = vrot.lane.b32.xlu0 %v849, 127
    %v859 = vpop.permute.xlu0 %858
    %860 = vrot.lane.b32.xlu0 %v850, 127
    %v861 = vpop.permute.xlu0 %860
    %862 = vrot.lane.b32.xlu0 %v851, 127
    %v863 = vpop.permute.xlu0 %862
    %v868 = vadd.f32 %v842, %v857
    %v869 = vadd.f32 %v843, %v859
    %v870 = vadd.f32 %v844, %v861
    %v871 = vadd.f32 %v845, %v863
    %s872 = sld [smem:[#allocation4 + $0xc]]
    %v873 = vstv %s872
    %v874 = vmul.f32 %v873, %v832
    %v875 = vmul.f32 %v873, %v833
    %v876 = vmul.f32 %v873, %v834
    %v877 = vmul.f32 %v873, %v835
    %882 = vrot.lane.b32.xlu0 %v874, 126
    %v883 = vpop.permute.xlu0 %882
    %884 = vrot.lane.b32.xlu0 %v875, 126
    %v885 = vpop.permute.xlu0 %884
    %886 = vrot.lane.b32.xlu0 %v876, 126
    %v887 = vpop.permute.xlu0 %886
    %888 = vrot.lane.b32.xlu0 %v877, 126
    %v889 = vpop.permute.xlu0 %888
    %v894 = vadd.f32 %v868, %v883
    %v895 = vadd.f32 %v869, %v885
    %v896 = vadd.f32 %v870, %v887
    %v897 = vadd.f32 %v871, %v889
    %s898 = sld [smem:[#allocation4 + $0xd]]
    %v899 = vstv %s898
    %v900 = vmul.f32 %v899, %v832
    %v901 = vmul.f32 %v899, %v833
    %v902 = vmul.f32 %v899, %v834
    %v903 = vmul.f32 %v899, %v835
    %908 = vrot.lane.b32.xlu0 %v900, 125
    %v909 = vpop.permute.xlu0 %908
    %910 = vrot.lane.b32.xlu0 %v901, 125
    %v911 = vpop.permute.xlu0 %910
    %912 = vrot.lane.b32.xlu0 %v902, 125
    %v913 = vpop.permute.xlu0 %912
    %914 = vrot.lane.b32.xlu0 %v903, 125
    %v915 = vpop.permute.xlu0 %914
    %v920 = vadd.f32 %v894, %v909
    %v921 = vadd.f32 %v895, %v911
    %v922 = vadd.f32 %v896, %v913
    %v923 = vadd.f32 %v897, %v915
    %s924 = sld [smem:[#allocation4 + $0xe]]
    %v925 = vstv %s924
    %v926 = vmul.f32 %v925, %v832
    %v927 = vmul.f32 %v925, %v833
    %v928 = vmul.f32 %v925, %v834
    %v929 = vmul.f32 %v925, %v835
    %934 = vrot.lane.b32.xlu0 %v926, 124
    %v935 = vpop.permute.xlu0 %934
    %936 = vrot.lane.b32.xlu0 %v927, 124
    %v937 = vpop.permute.xlu0 %936
    %938 = vrot.lane.b32.xlu0 %v928, 124
    %v939 = vpop.permute.xlu0 %938
    %940 = vrot.lane.b32.xlu0 %v929, 124
    %v941 = vpop.permute.xlu0 %940
    %v946 = vadd.f32 %v920, %v935
    %v947 = vadd.f32 %v921, %v937
    %v948 = vadd.f32 %v922, %v939
    %v949 = vadd.f32 %v923, %v941
    %v950 = vld [vmem:[#allocation2 + $0x3] sm:$0xff]
    %v951 = vld [vmem:[#allocation2 + $0xb] sm:$0xff]
    %v952 = vld [vmem:[#allocation2 + $0x1b] sm:$0xff]
    %v953 = vld [vmem:[#allocation2 + $0x23] sm:$0xff]
    %s954 = sld [smem:[#allocation4 + $0xf]]
    %v955 = vstv %s954
    %v956 = vmul.f32 %v955, %v950
    %v957 = vmul.f32 %v955, %v951
    %v958 = vmul.f32 %v955, %v952
    %v959 = vmul.f32 %v955, %v953
    %v960 = vadd.f32 %v946, %v956
    %v961 = vadd.f32 %v947, %v957
    %v962 = vadd.f32 %v948, %v958
    %v963 = vadd.f32 %v949, %v959
    %s964 = sld [smem:[#allocation4 + $0x10]]
    %v965 = vstv %s964
    %v966 = vmul.f32 %v965, %v950
    %v967 = vmul.f32 %v965, %v951
    %v968 = vmul.f32 %v965, %v952
    %v969 = vmul.f32 %v965, %v953
    %974 = vrot.lane.b32.xlu0 %v966, 127
    %v975 = vpop.permute.xlu0 %974
    %976 = vrot.lane.b32.xlu0 %v967, 127
    %v977 = vpop.permute.xlu0 %976
    %978 = vrot.lane.b32.xlu0 %v968, 127
    %v979 = vpop.permute.xlu0 %978
    %980 = vrot.lane.b32.xlu0 %v969, 127
    %v981 = vpop.permute.xlu0 %980
    %v986 = vadd.f32 %v960, %v975
    %v987 = vadd.f32 %v961, %v977
    %v988 = vadd.f32 %v962, %v979
    %v989 = vadd.f32 %v963, %v981
    %s990 = sld [smem:[#allocation4 + $0x11]]
    %v991 = vstv %s990
    %v992 = vmul.f32 %v991, %v950
    %v993 = vmul.f32 %v991, %v951
    %v994 = vmul.f32 %v991, %v952
    %v995 = vmul.f32 %v991, %v953
    %1000 = vrot.lane.b32.xlu0 %v992, 126
    %v1001 = vpop.permute.xlu0 %1000
    %1002 = vrot.lane.b32.xlu0 %v993, 126
    %v1003 = vpop.permute.xlu0 %1002
    %1004 = vrot.lane.b32.xlu0 %v994, 126
    %v1005 = vpop.permute.xlu0 %1004
    %1006 = vrot.lane.b32.xlu0 %v995, 126
    %v1007 = vpop.permute.xlu0 %1006
    %v1012 = vadd.f32 %v986, %v1001
    %v1013 = vadd.f32 %v987, %v1003
    %v1014 = vadd.f32 %v988, %v1005
    %v1015 = vadd.f32 %v989, %v1007
    %s1016 = sld [smem:[#allocation4 + $0x12]]
    %v1017 = vstv %s1016
    %v1018 = vmul.f32 %v1017, %v950
    %v1019 = vmul.f32 %v1017, %v951
    %v1020 = vmul.f32 %v1017, %v952
    %v1021 = vmul.f32 %v1017, %v953
    %1026 = vrot.lane.b32.xlu0 %v1018, 125
    %v1027 = vpop.permute.xlu0 %1026
    %1028 = vrot.lane.b32.xlu0 %v1019, 125
    %v1029 = vpop.permute.xlu0 %1028
    %1030 = vrot.lane.b32.xlu0 %v1020, 125
    %v1031 = vpop.permute.xlu0 %1030
    %1032 = vrot.lane.b32.xlu0 %v1021, 125
    %v1033 = vpop.permute.xlu0 %1032
    %v1038 = vadd.f32 %v1012, %v1027
    %v1039 = vadd.f32 %v1013, %v1029
    %v1040 = vadd.f32 %v1014, %v1031
    %v1041 = vadd.f32 %v1015, %v1033
    %s1042 = sld [smem:[#allocation4 + $0x13]]
    %v1043 = vstv %s1042
    %v1044 = vmul.f32 %v1043, %v950
    %v1045 = vmul.f32 %v1043, %v951
    %v1046 = vmul.f32 %v1043, %v952
    %v1047 = vmul.f32 %v1043, %v953
    %1052 = vrot.lane.b32.xlu0 %v1044, 124
    %v1053 = vpop.permute.xlu0 %1052
    %1054 = vrot.lane.b32.xlu0 %v1045, 124
    %v1055 = vpop.permute.xlu0 %1054
    %1056 = vrot.lane.b32.xlu0 %v1046, 124
    %v1057 = vpop.permute.xlu0 %1056
    %1058 = vrot.lane.b32.xlu0 %v1047, 124
    %v1059 = vpop.permute.xlu0 %1058
    %v1064 = vadd.f32 %v1038, %v1053
    %v1065 = vadd.f32 %v1039, %v1055
    %v1066 = vadd.f32 %v1040, %v1057
    %v1067 = vadd.f32 %v1041, %v1059
    %v1068 = vld [vmem:[#allocation2 + $0x4] sm:$0xff]
    %v1069 = vld [vmem:[#allocation2 + $0xc] sm:$0xff]
    %v1070 = vld [vmem:[#allocation2 + $0x1c] sm:$0xff]
    %v1071 = vld [vmem:[#allocation2 + $0x24] sm:$0xff]
    %s1072 = sld [smem:[#allocation4 + $0x14]]
    %v1073 = vstv %s1072
    %v1074 = vmul.f32 %v1073, %v1068
    %v1075 = vmul.f32 %v1073, %v1069
    %v1076 = vmul.f32 %v1073, %v1070
    %v1077 = vmul.f32 %v1073, %v1071
    %v1078 = vadd.f32 %v1064, %v1074
    %v1079 = vadd.f32 %v1065, %v1075
    %v1080 = vadd.f32 %v1066, %v1076
    %v1081 = vadd.f32 %v1067, %v1077
    %s1082 = sld [smem:[#allocation4 + $0x15]]
    %v1083 = vstv %s1082
    %v1084 = vmul.f32 %v1083, %v1068
    %v1085 = vmul.f32 %v1083, %v1069
    %v1086 = vmul.f32 %v1083, %v1070
    %v1087 = vmul.f32 %v1083, %v1071
    %1092 = vrot.lane.b32.xlu0 %v1084, 127
    %v1093 = vpop.permute.xlu0 %1092
    %1094 = vrot.lane.b32.xlu0 %v1085, 127
    %v1095 = vpop.permute.xlu0 %1094
    %1096 = vrot.lane.b32.xlu0 %v1086, 127
    %v1097 = vpop.permute.xlu0 %1096
    %1098 = vrot.lane.b32.xlu0 %v1087, 127
    %v1099 = vpop.permute.xlu0 %1098
    %v1104 = vadd.f32 %v1078, %v1093
    %v1105 = vadd.f32 %v1079, %v1095
    %v1106 = vadd.f32 %v1080, %v1097
    %v1107 = vadd.f32 %v1081, %v1099
    %s1108 = sld [smem:[#allocation4 + $0x16]]
    %v1109 = vstv %s1108
    %v1110 = vmul.f32 %v1109, %v1068
    %v1111 = vmul.f32 %v1109, %v1069
    %v1112 = vmul.f32 %v1109, %v1070
    %v1113 = vmul.f32 %v1109, %v1071
    %1118 = vrot.lane.b32.xlu0 %v1110, 126
    %v1119 = vpop.permute.xlu0 %1118
    %1120 = vrot.lane.b32.xlu0 %v1111, 126
    %v1121 = vpop.permute.xlu0 %1120
    %1122 = vrot.lane.b32.xlu0 %v1112, 126
    %v1123 = vpop.permute.xlu0 %1122
    %1124 = vrot.lane.b32.xlu0 %v1113, 126
    %v1125 = vpop.permute.xlu0 %1124
    %v1130 = vadd.f32 %v1104, %v1119
    %v1131 = vadd.f32 %v1105, %v1121
    %v1132 = vadd.f32 %v1106, %v1123
    %v1133 = vadd.f32 %v1107, %v1125
    %s1134 = sld [smem:[#allocation4 + $0x17]]
    %v1135 = vstv %s1134
    %v1136 = vmul.f32 %v1135, %v1068
    %v1137 = vmul.f32 %v1135, %v1069
    %v1138 = vmul.f32 %v1135, %v1070
    %v1139 = vmul.f32 %v1135, %v1071
    %1144 = vrot.lane.b32.xlu0 %v1136, 125
    %v1145 = vpop.permute.xlu0 %1144
    %1146 = vrot.lane.b32.xlu0 %v1137, 125
    %v1147 = vpop.permute.xlu0 %1146
    %1148 = vrot.lane.b32.xlu0 %v1138, 125
    %v1149 = vpop.permute.xlu0 %1148
    %1150 = vrot.lane.b32.xlu0 %v1139, 125
    %v1151 = vpop.permute.xlu0 %1150
    %v1156 = vadd.f32 %v1130, %v1145
    %v1157 = vadd.f32 %v1131, %v1147
    %v1158 = vadd.f32 %v1132, %v1149
    %v1159 = vadd.f32 %v1133, %v1151
    %s1160 = sld [smem:[#allocation4 + $0x18]]
    %v1161 = vstv %s1160
    %v1162 = vmul.f32 %v1161, %v1068
    %v1163 = vmul.f32 %v1161, %v1069
    %v1164 = vmul.f32 %v1161, %v1070
    %v1165 = vmul.f32 %v1161, %v1071
    %1170 = vrot.lane.b32.xlu0 %v1162, 124
    %v1171 = vpop.permute.xlu0 %1170
    %1172 = vrot.lane.b32.xlu0 %v1163, 124
    %v1173 = vpop.permute.xlu0 %1172
    %1174 = vrot.lane.b32.xlu0 %v1164, 124
    %v1175 = vpop.permute.xlu0 %1174
    %1176 = vrot.lane.b32.xlu0 %v1165, 124
    %v1177 = vpop.permute.xlu0 %1176
    %v1182 = vadd.f32 %v1156, %v1171
    %v1183 = vadd.f32 %v1157, %v1173
    %v1184 = vadd.f32 %v1158, %v1175
    %v1185 = vadd.f32 %v1159, %v1177
    %v1186 = vld [vmem:[%s589] sm:$0xff]
    %v1187 = vld [vmem:[%s589 + $0x8] sm:$0xff]
    %v1188 = vld [vmem:[%s589 + $0x18] sm:$0xff]
    %v1189 = vld [vmem:[%s589 + $0x20] sm:$0xff]
    %s1190 = sld [smem:[#allocation4 + $0x19]]
    %v1191 = vstv %s1190
    %v1192 = vmul.f32 %v1191, %v1186
    %v1193 = vmul.f32 %v1191, %v1187
    %v1194 = vmul.f32 %v1191, %v1188
    %v1195 = vmul.f32 %v1191, %v1189
    %v1196 = vadd.f32 %v1182, %v1192
    %v1197 = vadd.f32 %v1183, %v1193
    %v1198 = vadd.f32 %v1184, %v1194
    %v1199 = vadd.f32 %v1185, %v1195
    %s1200 = sld [smem:[#allocation4 + $0x1a]]
    %v1201 = vstv %s1200
    %v1202 = vmul.f32 %v1201, %v1186
    %v1203 = vmul.f32 %v1201, %v1187
    %v1204 = vmul.f32 %v1201, %v1188
    %v1205 = vmul.f32 %v1201, %v1189
    %1210 = vrot.lane.b32.xlu0 %v1202, 127
    %v1211 = vpop.permute.xlu0 %1210
    %1212 = vrot.lane.b32.xlu0 %v1203, 127
    %v1213 = vpop.permute.xlu0 %1212
    %1214 = vrot.lane.b32.xlu0 %v1204, 127
    %v1215 = vpop.permute.xlu0 %1214
    %1216 = vrot.lane.b32.xlu0 %v1205, 127
    %v1217 = vpop.permute.xlu0 %1216
    %v1222 = vadd.f32 %v1196, %v1211
    %v1223 = vadd.f32 %v1197, %v1213
    %v1224 = vadd.f32 %v1198, %v1215
    %v1225 = vadd.f32 %v1199, %v1217
    %s1226 = sld [smem:[#allocation4 + $0x1b]]
    %v1227 = vstv %s1226
    %v1228 = vmul.f32 %v1227, %v1186
    %v1229 = vmul.f32 %v1227, %v1187
    %v1230 = vmul.f32 %v1227, %v1188
    %v1231 = vmul.f32 %v1227, %v1189
    %1236 = vrot.lane.b32.xlu0 %v1228, 126
    %v1237 = vpop.permute.xlu0 %1236
    %1238 = vrot.lane.b32.xlu0 %v1229, 126
    %v1239 = vpop.permute.xlu0 %1238
    %1240 = vrot.lane.b32.xlu0 %v1230, 126
    %v1241 = vpop.permute.xlu0 %1240
    %1242 = vrot.lane.b32.xlu0 %v1231, 126
    %v1243 = vpop.permute.xlu0 %1242
    %v1248 = vadd.f32 %v1222, %v1237
    %v1249 = vadd.f32 %v1223, %v1239
    %v1250 = vadd.f32 %v1224, %v1241
    %v1251 = vadd.f32 %v1225, %v1243
    %s1252 = sld [smem:[#allocation4 + $0x1c]]
    %v1253 = vstv %s1252
    %v1254 = vmul.f32 %v1253, %v1186
    %v1255 = vmul.f32 %v1253, %v1187
    %v1256 = vmul.f32 %v1253, %v1188
    %v1257 = vmul.f32 %v1253, %v1189
    %1262 = vrot.lane.b32.xlu0 %v1254, 125
    %v1263 = vpop.permute.xlu0 %1262
    %1264 = vrot.lane.b32.xlu0 %v1255, 125
    %v1265 = vpop.permute.xlu0 %1264
    %1266 = vrot.lane.b32.xlu0 %v1256, 125
    %v1267 = vpop.permute.xlu0 %1266
    %1268 = vrot.lane.b32.xlu0 %v1257, 125
    %v1269 = vpop.permute.xlu0 %1268
    %v1274 = vadd.f32 %v1248, %v1263
    %v1275 = vadd.f32 %v1249, %v1265
    %v1276 = vadd.f32 %v1250, %v1267
    %v1277 = vadd.f32 %v1251, %v1269
    %s1278 = sld [smem:[#allocation4 + $0x1d]]
    %v1279 = vstv %s1278
    %v1280 = vmul.f32 %v1279, %v1186
    %v1281 = vmul.f32 %v1279, %v1187
    %v1282 = vmul.f32 %v1279, %v1188
    %v1283 = vmul.f32 %v1279, %v1189
    %1288 = vrot.lane.b32.xlu0 %v1280, 124
    %v1289 = vpop.permute.xlu0 %1288
    %1290 = vrot.lane.b32.xlu0 %v1281, 124
    %v1291 = vpop.permute.xlu0 %1290
    %1292 = vrot.lane.b32.xlu0 %v1282, 124
    %v1293 = vpop.permute.xlu0 %1292
    %1294 = vrot.lane.b32.xlu0 %v1283, 124
    %v1295 = vpop.permute.xlu0 %1294
    %v1300 = vadd.f32 %v1274, %v1289
    %v1301 = vadd.f32 %v1275, %v1291
    %v1302 = vadd.f32 %v1276, %v1293
    %v1303 = vadd.f32 %v1277, %v1295
    %v1304 = vld [vmem:[%s589 + $0x1] sm:$0xff]
    %v1305 = vld [vmem:[%s589 + $0x9] sm:$0xff]
    %v1306 = vld [vmem:[%s589 + $0x19] sm:$0xff]
    %v1307 = vld [vmem:[%s589 + $0x21] sm:$0xff]
    %s1308 = sld [smem:[#allocation4 + $0x1e]]
    %v1309 = vstv %s1308
    %v1310 = vmul.f32 %v1309, %v1304
    %v1311 = vmul.f32 %v1309, %v1305
    %v1312 = vmul.f32 %v1309, %v1306
    %v1313 = vmul.f32 %v1309, %v1307
    %v1314 = vadd.f32 %v1300, %v1310
    %v1315 = vadd.f32 %v1301, %v1311
    %v1316 = vadd.f32 %v1302, %v1312
    %v1317 = vadd.f32 %v1303, %v1313
    %s1318 = sld [smem:[#allocation4 + $0x1f]]
    %v1319 = vstv %s1318
    %v1320 = vmul.f32 %v1319, %v1304
    %v1321 = vmul.f32 %v1319, %v1305
    %v1322 = vmul.f32 %v1319, %v1306
    %v1323 = vmul.f32 %v1319, %v1307
    %1328 = vrot.lane.b32.xlu0 %v1320, 127
    %v1329 = vpop.permute.xlu0 %1328
    %1330 = vrot.lane.b32.xlu0 %v1321, 127
    %v1331 = vpop.permute.xlu0 %1330
    %1332 = vrot.lane.b32.xlu0 %v1322, 127
    %v1333 = vpop.permute.xlu0 %1332
    %1334 = vrot.lane.b32.xlu0 %v1323, 127
    %v1335 = vpop.permute.xlu0 %1334
    %v1340 = vadd.f32 %v1314, %v1329
    %v1341 = vadd.f32 %v1315, %v1331
    %v1342 = vadd.f32 %v1316, %v1333
    %v1343 = vadd.f32 %v1317, %v1335
    %s1344 = sld [smem:[#allocation4 + $0x20]]
    %v1345 = vstv %s1344
    %v1346 = vmul.f32 %v1345, %v1304
    %v1347 = vmul.f32 %v1345, %v1305
    %v1348 = vmul.f32 %v1345, %v1306
    %v1349 = vmul.f32 %v1345, %v1307
    %1354 = vrot.lane.b32.xlu0 %v1346, 126
    %v1355 = vpop.permute.xlu0 %1354
    %1356 = vrot.lane.b32.xlu0 %v1347, 126
    %v1357 = vpop.permute.xlu0 %1356
    %1358 = vrot.lane.b32.xlu0 %v1348, 126
    %v1359 = vpop.permute.xlu0 %1358
    %1360 = vrot.lane.b32.xlu0 %v1349, 126
    %v1361 = vpop.permute.xlu0 %1360
    %v1366 = vadd.f32 %v1340, %v1355
    %v1367 = vadd.f32 %v1341, %v1357
    %v1368 = vadd.f32 %v1342, %v1359
    %v1369 = vadd.f32 %v1343, %v1361
    %s1370 = sld [smem:[#allocation4 + $0x21]]
    %v1371 = vstv %s1370
    %v1372 = vmul.f32 %v1371, %v1304
    %v1373 = vmul.f32 %v1371, %v1305
    %v1374 = vmul.f32 %v1371, %v1306
    %v1375 = vmul.f32 %v1371, %v1307
    %1380 = vrot.lane.b32.xlu0 %v1372, 125
    %v1381 = vpop.permute.xlu0 %1380
    %1382 = vrot.lane.b32.xlu0 %v1373, 125
    %v1383 = vpop.permute.xlu0 %1382
    %1384 = vrot.lane.b32.xlu0 %v1374, 125
    %v1385 = vpop.permute.xlu0 %1384
    %1386 = vrot.lane.b32.xlu0 %v1375, 125
    %v1387 = vpop.permute.xlu0 %1386
    %v1392 = vadd.f32 %v1366, %v1381
    %v1393 = vadd.f32 %v1367, %v1383
    %v1394 = vadd.f32 %v1368, %v1385
    %v1395 = vadd.f32 %v1369, %v1387
    %s1396 = sld [smem:[#allocation4 + $0x22]]
    %v1397 = vstv %s1396
    %v1398 = vmul.f32 %v1397, %v1304
    %v1399 = vmul.f32 %v1397, %v1305
    %v1400 = vmul.f32 %v1397, %v1306
    %v1401 = vmul.f32 %v1397, %v1307
    %1406 = vrot.lane.b32.xlu0 %v1398, 124
    %v1407 = vpop.permute.xlu0 %1406
    %1408 = vrot.lane.b32.xlu0 %v1399, 124
    %v1409 = vpop.permute.xlu0 %1408
    %1410 = vrot.lane.b32.xlu0 %v1400, 124
    %v1411 = vpop.permute.xlu0 %1410
    %1412 = vrot.lane.b32.xlu0 %v1401, 124
    %v1413 = vpop.permute.xlu0 %1412
    %v1418 = vadd.f32 %v1392, %v1407
    %v1419 = vadd.f32 %v1393, %v1409
    %v1420 = vadd.f32 %v1394, %v1411
    %v1421 = vadd.f32 %v1395, %v1413
    %v1422 = vld [vmem:[%s589 + $0x2] sm:$0xff]
    %v1423 = vld [vmem:[%s589 + $0xa] sm:$0xff]
    %v1424 = vld [vmem:[%s589 + $0x1a] sm:$0xff]
    %v1425 = vld [vmem:[%s589 + $0x22] sm:$0xff]
    %s1426 = sld [smem:[#allocation4 + $0x23]]
    %v1427 = vstv %s1426
    %v1428 = vmul.f32 %v1427, %v1422
    %v1429 = vmul.f32 %v1427, %v1423
    %v1430 = vmul.f32 %v1427, %v1424
    %v1431 = vmul.f32 %v1427, %v1425
    %v1432 = vadd.f32 %v1418, %v1428
    %v1433 = vadd.f32 %v1419, %v1429
    %v1434 = vadd.f32 %v1420, %v1430
    %v1435 = vadd.f32 %v1421, %v1431
    %s1436 = sld [smem:[#allocation4 + $0x24]]
    %v1437 = vstv %s1436
    %v1438 = vmul.f32 %v1437, %v1422
    %v1439 = vmul.f32 %v1437, %v1423
    %v1440 = vmul.f32 %v1437, %v1424
    %v1441 = vmul.f32 %v1437, %v1425
    %1446 = vrot.lane.b32.xlu0 %v1438, 127
    %v1447 = vpop.permute.xlu0 %1446
    %1448 = vrot.lane.b32.xlu0 %v1439, 127
    %v1449 = vpop.permute.xlu0 %1448
    %1450 = vrot.lane.b32.xlu0 %v1440, 127
    %v1451 = vpop.permute.xlu0 %1450
    %1452 = vrot.lane.b32.xlu0 %v1441, 127
    %v1453 = vpop.permute.xlu0 %1452
    %v1458 = vadd.f32 %v1432, %v1447
    %v1459 = vadd.f32 %v1433, %v1449
    %v1460 = vadd.f32 %v1434, %v1451
    %v1461 = vadd.f32 %v1435, %v1453
    %s1462 = sld [smem:[#allocation4 + $0x25]]
    %v1463 = vstv %s1462
    %v1464 = vmul.f32 %v1463, %v1422
    %v1465 = vmul.f32 %v1463, %v1423
    %v1466 = vmul.f32 %v1463, %v1424
    %v1467 = vmul.f32 %v1463, %v1425
    %1472 = vrot.lane.b32.xlu0 %v1464, 126
    %v1473 = vpop.permute.xlu0 %1472
    %1474 = vrot.lane.b32.xlu0 %v1465, 126
    %v1475 = vpop.permute.xlu0 %1474
    %1476 = vrot.lane.b32.xlu0 %v1466, 126
    %v1477 = vpop.permute.xlu0 %1476
    %1478 = vrot.lane.b32.xlu0 %v1467, 126
    %v1479 = vpop.permute.xlu0 %1478
    %v1484 = vadd.f32 %v1458, %v1473
    %v1485 = vadd.f32 %v1459, %v1475
    %v1486 = vadd.f32 %v1460, %v1477
    %v1487 = vadd.f32 %v1461, %v1479
    %s1488 = sld [smem:[#allocation4 + $0x26]]
    %v1489 = vstv %s1488
    %v1490 = vmul.f32 %v1489, %v1422
    %v1491 = vmul.f32 %v1489, %v1423
    %v1492 = vmul.f32 %v1489, %v1424
    %v1493 = vmul.f32 %v1489, %v1425
    %1498 = vrot.lane.b32.xlu0 %v1490, 125
    %v1499 = vpop.permute.xlu0 %1498
    %1500 = vrot.lane.b32.xlu0 %v1491, 125
    %v1501 = vpop.permute.xlu0 %1500
    %1502 = vrot.lane.b32.xlu0 %v1492, 125
    %v1503 = vpop.permute.xlu0 %1502
    %1504 = vrot.lane.b32.xlu0 %v1493, 125
    %v1505 = vpop.permute.xlu0 %1504
    %v1510 = vadd.f32 %v1484, %v1499
    %v1511 = vadd.f32 %v1485, %v1501
    %v1512 = vadd.f32 %v1486, %v1503
    %v1513 = vadd.f32 %v1487, %v1505
    %s1514 = sld [smem:[#allocation4 + $0x27]]
    %v1515 = vstv %s1514
    %v1516 = vmul.f32 %v1515, %v1422
    %v1517 = vmul.f32 %v1515, %v1423
    %v1518 = vmul.f32 %v1515, %v1424
    %v1519 = vmul.f32 %v1515, %v1425
    %1524 = vrot.lane.b32.xlu0 %v1516, 124
    %v1525 = vpop.permute.xlu0 %1524
    %1526 = vrot.lane.b32.xlu0 %v1517, 124
    %v1527 = vpop.permute.xlu0 %1526
    %1528 = vrot.lane.b32.xlu0 %v1518, 124
    %v1529 = vpop.permute.xlu0 %1528
    %1530 = vrot.lane.b32.xlu0 %v1519, 124
    %v1531 = vpop.permute.xlu0 %1530
    %v1536 = vadd.f32 %v1510, %v1525
    %v1537 = vadd.f32 %v1511, %v1527
    %v1538 = vadd.f32 %v1512, %v1529
    %v1539 = vadd.f32 %v1513, %v1531
    %v1540 = vld [vmem:[%s589 + $0x3] sm:$0xff]
    %v1541 = vld [vmem:[%s589 + $0xb] sm:$0xff]
    %v1542 = vld [vmem:[%s589 + $0x1b] sm:$0xff]
    %v1543 = vld [vmem:[%s589 + $0x23] sm:$0xff]
    %s1544 = sld [smem:[#allocation4 + $0x28]]
    %v1545 = vstv %s1544
    %v1546 = vmul.f32 %v1545, %v1540
    %v1547 = vmul.f32 %v1545, %v1541
    %v1548 = vmul.f32 %v1545, %v1542
    %v1549 = vmul.f32 %v1545, %v1543
    %v1550 = vadd.f32 %v1536, %v1546
    %v1551 = vadd.f32 %v1537, %v1547
    %v1552 = vadd.f32 %v1538, %v1548
    %v1553 = vadd.f32 %v1539, %v1549
    %s1554 = sld [smem:[#allocation4 + $0x29]]
    %v1555 = vstv %s1554
    %v1556 = vmul.f32 %v1555, %v1540
    %v1557 = vmul.f32 %v1555, %v1541
    %v1558 = vmul.f32 %v1555, %v1542
    %v1559 = vmul.f32 %v1555, %v1543
    %1564 = vrot.lane.b32.xlu0 %v1556, 127
    %v1565 = vpop.permute.xlu0 %1564
    %1566 = vrot.lane.b32.xlu0 %v1557, 127
    %v1567 = vpop.permute.xlu0 %1566
    %1568 = vrot.lane.b32.xlu0 %v1558, 127
    %v1569 = vpop.permute.xlu0 %1568
    %1570 = vrot.lane.b32.xlu0 %v1559, 127
    %v1571 = vpop.permute.xlu0 %1570
    %v1576 = vadd.f32 %v1550, %v1565
    %v1577 = vadd.f32 %v1551, %v1567
    %v1578 = vadd.f32 %v1552, %v1569
    %v1579 = vadd.f32 %v1553, %v1571
    %s1580 = sld [smem:[#allocation4 + $0x2a]]
    %v1581 = vstv %s1580
    %v1582 = vmul.f32 %v1581, %v1540
    %v1583 = vmul.f32 %v1581, %v1541
    %v1584 = vmul.f32 %v1581, %v1542
    %v1585 = vmul.f32 %v1581, %v1543
    %1590 = vrot.lane.b32.xlu0 %v1582, 126
    %v1591 = vpop.permute.xlu0 %1590
    %1592 = vrot.lane.b32.xlu0 %v1583, 126
    %v1593 = vpop.permute.xlu0 %1592
    %1594 = vrot.lane.b32.xlu0 %v1584, 126
    %v1595 = vpop.permute.xlu0 %1594
    %1596 = vrot.lane.b32.xlu0 %v1585, 126
    %v1597 = vpop.permute.xlu0 %1596
    %v1602 = vadd.f32 %v1576, %v1591
    %v1603 = vadd.f32 %v1577, %v1593
    %v1604 = vadd.f32 %v1578, %v1595
    %v1605 = vadd.f32 %v1579, %v1597
    %s1606 = sld [smem:[#allocation4 + $0x2b]]
    %v1607 = vstv %s1606
    %v1608 = vmul.f32 %v1607, %v1540
    %v1609 = vmul.f32 %v1607, %v1541
    %v1610 = vmul.f32 %v1607, %v1542
    %v1611 = vmul.f32 %v1607, %v1543
    %1616 = vrot.lane.b32.xlu0 %v1608, 125
    %v1617 = vpop.permute.xlu0 %1616
    %1618 = vrot.lane.b32.xlu0 %v1609, 125
    %v1619 = vpop.permute.xlu0 %1618
    %1620 = vrot.lane.b32.xlu0 %v1610, 125
    %v1621 = vpop.permute.xlu0 %1620
    %1622 = vrot.lane.b32.xlu0 %v1611, 125
    %v1623 = vpop.permute.xlu0 %1622
    %v1628 = vadd.f32 %v1602, %v1617
    %v1629 = vadd.f32 %v1603, %v1619
    %v1630 = vadd.f32 %v1604, %v1621
    %v1631 = vadd.f32 %v1605, %v1623
    %s1632 = sld [smem:[#allocation4 + $0x2c]]
    %v1633 = vstv %s1632
    %v1634 = vmul.f32 %v1633, %v1540
    %v1635 = vmul.f32 %v1633, %v1541
    %v1636 = vmul.f32 %v1633, %v1542
    %v1637 = vmul.f32 %v1633, %v1543
    %1642 = vrot.lane.b32.xlu0 %v1634, 124
    %v1643 = vpop.permute.xlu0 %1642
    %1644 = vrot.lane.b32.xlu0 %v1635, 124
    %v1645 = vpop.permute.xlu0 %1644
    %1646 = vrot.lane.b32.xlu0 %v1636, 124
    %v1647 = vpop.permute.xlu0 %1646
    %1648 = vrot.lane.b32.xlu0 %v1637, 124
    %v1649 = vpop.permute.xlu0 %1648
    %v1654 = vadd.f32 %v1628, %v1643
    %v1655 = vadd.f32 %v1629, %v1645
    %v1656 = vadd.f32 %v1630, %v1647
    %v1657 = vadd.f32 %v1631, %v1649
    %v1658 = vld [vmem:[%s589 + $0x4] sm:$0xff]
    %v1659 = vld [vmem:[%s589 + $0xc] sm:$0xff]
    %v1660 = vld [vmem:[%s589 + $0x1c] sm:$0xff]
    %v1661 = vld [vmem:[%s589 + $0x24] sm:$0xff]
    %s1662 = sld [smem:[#allocation4 + $0x2d]]
    %v1663 = vstv %s1662
    %v1664 = vmul.f32 %v1663, %v1658
    %v1665 = vmul.f32 %v1663, %v1659
    %v1666 = vmul.f32 %v1663, %v1660
    %v1667 = vmul.f32 %v1663, %v1661
    %v1668 = vadd.f32 %v1654, %v1664
    %v1669 = vadd.f32 %v1655, %v1665
    %v1670 = vadd.f32 %v1656, %v1666
    %v1671 = vadd.f32 %v1657, %v1667
    %s1672 = sld [smem:[#allocation4 + $0x2e]]
    %v1673 = vstv %s1672
    %v1674 = vmul.f32 %v1673, %v1658
    %v1675 = vmul.f32 %v1673, %v1659
    %v1676 = vmul.f32 %v1673, %v1660
    %v1677 = vmul.f32 %v1673, %v1661
    %1682 = vrot.lane.b32.xlu0 %v1674, 127
    %v1683 = vpop.permute.xlu0 %1682
    %1684 = vrot.lane.b32.xlu0 %v1675, 127
    %v1685 = vpop.permute.xlu0 %1684
    %1686 = vrot.lane.b32.xlu0 %v1676, 127
    %v1687 = vpop.permute.xlu0 %1686
    %1688 = vrot.lane.b32.xlu0 %v1677, 127
    %v1689 = vpop.permute.xlu0 %1688
    %v1694 = vadd.f32 %v1668, %v1683
    %v1695 = vadd.f32 %v1669, %v1685
    %v1696 = vadd.f32 %v1670, %v1687
    %v1697 = vadd.f32 %v1671, %v1689
    %s1698 = sld [smem:[#allocation4 + $0x2f]]
    %v1699 = vstv %s1698
    %v1700 = vmul.f32 %v1699, %v1658
    %v1701 = vmul.f32 %v1699, %v1659
    %v1702 = vmul.f32 %v1699, %v1660
    %v1703 = vmul.f32 %v1699, %v1661
    %1708 = vrot.lane.b32.xlu0 %v1700, 126
    %v1709 = vpop.permute.xlu0 %1708
    %1710 = vrot.lane.b32.xlu0 %v1701, 126
    %v1711 = vpop.permute.xlu0 %1710
    %1712 = vrot.lane.b32.xlu0 %v1702, 126
    %v1713 = vpop.permute.xlu0 %1712
    %1714 = vrot.lane.b32.xlu0 %v1703, 126
    %v1715 = vpop.permute.xlu0 %1714
    %v1720 = vadd.f32 %v1694, %v1709
    %v1721 = vadd.f32 %v1695, %v1711
    %v1722 = vadd.f32 %v1696, %v1713
    %v1723 = vadd.f32 %v1697, %v1715
    %s1724 = sld [smem:[#allocation4 + $0x30]]
    %v1725 = vstv %s1724
    %v1726 = vmul.f32 %v1725, %v1658
    %v1727 = vmul.f32 %v1725, %v1659
    %v1728 = vmul.f32 %v1725, %v1660
    %v1729 = vmul.f32 %v1725, %v1661
    %1734 = vrot.lane.b32.xlu0 %v1726, 125
    %v1735 = vpop.permute.xlu0 %1734
    %1736 = vrot.lane.b32.xlu0 %v1727, 125
    %v1737 = vpop.permute.xlu0 %1736
    %1738 = vrot.lane.b32.xlu0 %v1728, 125
    %v1739 = vpop.permute.xlu0 %1738
    %1740 = vrot.lane.b32.xlu0 %v1729, 125
    %v1741 = vpop.permute.xlu0 %1740
    %v1746 = vadd.f32 %v1720, %v1735
    %v1747 = vadd.f32 %v1721, %v1737
    %v1748 = vadd.f32 %v1722, %v1739
    %v1749 = vadd.f32 %v1723, %v1741
    %s1750 = sld [smem:[#allocation4 + $0x31]]
    %v1751 = vstv %s1750
    %v1752 = vmul.f32 %v1751, %v1658
    %v1753 = vmul.f32 %v1751, %v1659
    %v1754 = vmul.f32 %v1751, %v1660
    %v1755 = vmul.f32 %v1751, %v1661
    %1760 = vrot.lane.b32.xlu0 %v1752, 124
    %v1761 = vpop.permute.xlu0 %1760
    %1762 = vrot.lane.b32.xlu0 %v1753, 124
    %v1763 = vpop.permute.xlu0 %1762
    %1764 = vrot.lane.b32.xlu0 %v1754, 124
    %v1765 = vpop.permute.xlu0 %1764
    %1766 = vrot.lane.b32.xlu0 %v1755, 124
    %v1767 = vpop.permute.xlu0 %1766
    %v1772 = vadd.f32 %v1746, %v1761
    %v1773 = vadd.f32 %v1747, %v1763
    %v1774 = vadd.f32 %v1748, %v1765
    %v1775 = vadd.f32 %v1749, %v1767
    %v1776 = vmax.f32 %v1772, 0.0
    %v1777 = vmax.f32 %v1773, 0.0
    %v1778 = vmax.f32 %v1774, 0.0
    %v1779 = vmax.f32 %v1775, 0.0
    %v1780 = vsub.f32 0.0, %v1776
    %v1781 = vsub.f32 0.0, %v1777
    %v1782 = vsub.f32 0.0, %v1778
    %v1783 = vsub.f32 0.0, %v1779
    %v1784 = vmul.f32 %v1780, 1.442695
    %v1785 = vpow.pop %v1784
    %v1786 = vmul.f32 %v1781, 1.442695
    %v1787 = vpow.pop %v1786
    %v1788 = vmul.f32 %v1782, 1.442695
    %v1789 = vpow.pop %v1788
    %v1790 = vmul.f32 %v1783, 1.442695
    %v1791 = vpow.pop %v1790
    %v1792 = vadd.f32 %v1785, 1.0
    %v1793 = vadd.f32 %v1787, 1.0
    %v1794 = vadd.f32 %v1789, 1.0
    %v1795 = vadd.f32 %v1791, 1.0
    %v1796 = vrcp.pop %v1792
    %v1797 = vmul.f32 1.0, %v1796
    %v1798 = vrcp.pop %v1793
    %v1799 = vmul.f32 1.0, %v1798
    %v1800 = vrcp.pop %v1794
    %v1801 = vmul.f32 1.0, %v1800
    %v1802 = vrcp.pop %v1795
    %v1803 = vmul.f32 1.0, %v1802
    %v1804 = vcombine.high %v1797, 0.0
    %v1806 = vunpack.c.l.s4 1983009808
    %v1807 = vunpack.c.0.s8 %v1806
    %v1808 = vlaneseq
    %v1809 = vshrl.u32 %v1808, 7
    %v1810 = vsub.s32 %v1807, %v1809
    %v1811 = vrot.slane %v1797, %v1810
    %v1813 = vunpack.c.l.s4 1983009808
    %v1814 = vunpack.c.0.s8 %v1813
    %v1815 = vlaneseq
    %v1816 = vshrl.u32 %v1815, 7
    %v1817 = vsub.s32 %v1814, %v1816
    %v1818 = vrot.slane %v1804, %v1817
    %v1819 = vcombine.high %v1811, 0.0
    %v1821 = vunpack.c.l.s4 1934713408
    %v1822 = vunpack.c.0.s8 %v1821
    %v1823 = vlaneseq
    %v1824 = vshrl.u32 %v1823, 7
    %v1825 = vsub.s32 %v1822, %v1824
    %v1826 = vrot.slane %v1811, %v1825
    %v1828 = vunpack.c.l.s4 1934713408
    %v1829 = vunpack.c.0.s8 %v1828
    %v1830 = vlaneseq
    %v1831 = vshrl.u32 %v1830, 7
    %v1832 = vsub.s32 %v1829, %v1831
    %v1833 = vrot.slane %v1819, %v1832
    %v1834 = vcombine.high %v1818, 0.0
    %v1836 = vunpack.c.l.s4 1934713408
    %v1837 = vunpack.c.0.s8 %v1836
    %v1838 = vlaneseq
    %v1839 = vshrl.u32 %v1838, 7
    %v1840 = vsub.s32 %v1837, %v1839
    %v1841 = vrot.slane %v1818, %v1840
    %v1843 = vunpack.c.l.s4 1934713408
    %v1844 = vunpack.c.0.s8 %v1843
    %v1845 = vlaneseq
    %v1846 = vshrl.u32 %v1845, 7
    %v1847 = vsub.s32 %v1844, %v1846
    %v1848 = vrot.slane %v1834, %v1847
    %v1849 = vcombine.high %v1826, 0.0
    %v1850 = vcombine.high %v1833, 0.0
    %v1851 = vcombine.high %v1841, 0.0
    %v1852 = vcombine.high %v1848, 0.0
    %v1853 = vcombine.high %v1799, 0.0
    %v1855 = vunpack.c.l.s4 1983009808
    %v1856 = vunpack.c.0.s8 %v1855
    %v1857 = vlaneseq
    %v1858 = vshrl.u32 %v1857, 7
    %v1859 = vsub.s32 %v1856, %v1858
    %v1860 = vrot.slane %v1799, %v1859
    %v1862 = vunpack.c.l.s4 1983009808
    %v1863 = vunpack.c.0.s8 %v1862
    %v1864 = vlaneseq
    %v1865 = vshrl.u32 %v1864, 7
    %v1866 = vsub.s32 %v1863, %v1865
    %v1867 = vrot.slane %v1853, %v1866
    %v1868 = vcombine.high %v1860, 0.0
    %v1870 = vunpack.c.l.s4 1934713408
    %v1871 = vunpack.c.0.s8 %v1870
    %v1872 = vlaneseq
    %v1873 = vshrl.u32 %v1872, 7
    %v1874 = vsub.s32 %v1871, %v1873
    %v1875 = vrot.slane %v1860, %v1874
    %v1877 = vunpack.c.l.s4 1934713408
    %v1878 = vunpack.c.0.s8 %v1877
    %v1879 = vlaneseq
    %v1880 = vshrl.u32 %v1879, 7
    %v1881 = vsub.s32 %v1878, %v1880
    %v1882 = vrot.slane %v1868, %v1881
    %v1883 = vcombine.high %v1867, 0.0
    %v1885 = vunpack.c.l.s4 1934713408
    %v1886 = vunpack.c.0.s8 %v1885
    %v1887 = vlaneseq
    %v1888 = vshrl.u32 %v1887, 7
    %v1889 = vsub.s32 %v1886, %v1888
    %v1890 = vrot.slane %v1867, %v1889
    %v1892 = vunpack.c.l.s4 1934713408
    %v1893 = vunpack.c.0.s8 %v1892
    %v1894 = vlaneseq
    %v1895 = vshrl.u32 %v1894, 7
    %v1896 = vsub.s32 %v1893, %v1895
    %v1897 = vrot.slane %v1883, %v1896
    %v1898 = vcombine.high %v1875, 0.0
    %v1899 = vcombine.high %v1882, 0.0
    %v1900 = vcombine.high %v1890, 0.0
    %v1901 = vcombine.high %v1897, 0.0
    %v1902 = vcombine.high %v1801, 0.0
    %v1904 = vunpack.c.l.s4 1983009808
    %v1905 = vunpack.c.0.s8 %v1904
    %v1906 = vlaneseq
    %v1907 = vshrl.u32 %v1906, 7
    %v1908 = vsub.s32 %v1905, %v1907
    %v1909 = vrot.slane %v1801, %v1908
    %v1911 = vunpack.c.l.s4 1983009808
    %v1912 = vunpack.c.0.s8 %v1911
    %v1913 = vlaneseq
    %v1914 = vshrl.u32 %v1913, 7
    %v1915 = vsub.s32 %v1912, %v1914
    %v1916 = vrot.slane %v1902, %v1915
    %v1917 = vcombine.high %v1909, 0.0
    %v1919 = vunpack.c.l.s4 1934713408
    %v1920 = vunpack.c.0.s8 %v1919
    %v1921 = vlaneseq
    %v1922 = vshrl.u32 %v1921, 7
    %v1923 = vsub.s32 %v1920, %v1922
    %v1924 = vrot.slane %v1909, %v1923
    %v1926 = vunpack.c.l.s4 1934713408
    %v1927 = vunpack.c.0.s8 %v1926
    %v1928 = vlaneseq
    %v1929 = vshrl.u32 %v1928, 7
    %v1930 = vsub.s32 %v1927, %v1929
    %v1931 = vrot.slane %v1917, %v1930
    %v1932 = vcombine.high %v1916, 0.0
    %v1934 = vunpack.c.l.s4 1934713408
    %v1935 = vunpack.c.0.s8 %v1934
    %v1936 = vlaneseq
    %v1937 = vshrl.u32 %v1936, 7
    %v1938 = vsub.s32 %v1935, %v1937
    %v1939 = vrot.slane %v1916, %v1938
    %v1941 = vunpack.c.l.s4 1934713408
    %v1942 = vunpack.c.0.s8 %v1941
    %v1943 = vlaneseq
    %v1944 = vshrl.u32 %v1943, 7
    %v1945 = vsub.s32 %v1942, %v1944
    %v1946 = vrot.slane %v1932, %v1945
    %v1947 = vcombine.high %v1924, 0.0
    %v1948 = vcombine.high %v1931, 0.0
    %v1949 = vcombine.high %v1939, 0.0
    %v1950 = vcombine.high %v1946, 0.0
    %v1951 = vcombine.high %v1803, 0.0
    %v1953 = vunpack.c.l.s4 1983009808
    %v1954 = vunpack.c.0.s8 %v1953
    %v1955 = vlaneseq
    %v1956 = vshrl.u32 %v1955, 7
    %v1957 = vsub.s32 %v1954, %v1956
    %v1958 = vrot.slane %v1803, %v1957
    %v1960 = vunpack.c.l.s4 1983009808
    %v1961 = vunpack.c.0.s8 %v1960
    %v1962 = vlaneseq
    %v1963 = vshrl.u32 %v1962, 7
    %v1964 = vsub.s32 %v1961, %v1963
    %v1965 = vrot.slane %v1951, %v1964
    %v1966 = vcombine.high %v1958, 0.0
    %v1968 = vunpack.c.l.s4 1934713408
    %v1969 = vunpack.c.0.s8 %v1968
    %v1970 = vlaneseq
    %v1971 = vshrl.u32 %v1970, 7
    %v1972 = vsub.s32 %v1969, %v1971
    %v1973 = vrot.slane %v1958, %v1972
    %v1975 = vunpack.c.l.s4 1934713408
    %v1976 = vunpack.c.0.s8 %v1975
    %v1977 = vlaneseq
    %v1978 = vshrl.u32 %v1977, 7
    %v1979 = vsub.s32 %v1976, %v1978
    %v1980 = vrot.slane %v1966, %v1979
    %v1981 = vcombine.high %v1965, 0.0
    %v1983 = vunpack.c.l.s4 1934713408
    %v1984 = vunpack.c.0.s8 %v1983
    %v1985 = vlaneseq
    %v1986 = vshrl.u32 %v1985, 7
    %v1987 = vsub.s32 %v1984, %v1986
    %v1988 = vrot.slane %v1965, %v1987
    %v1990 = vunpack.c.l.s4 1934713408
    %v1991 = vunpack.c.0.s8 %v1990
    %v1992 = vlaneseq
    %v1993 = vshrl.u32 %v1992, 7
    %v1994 = vsub.s32 %v1991, %v1993
    %v1995 = vrot.slane %v1981, %v1994
    %v1996 = vcombine.high %v1973, 0.0
    %v1997 = vcombine.high %v1980, 0.0
    %v1998 = vcombine.high %v1988, 0.0
    %v1999 = vcombine.high %v1995, 0.0
    %2002 = vrot.lane.b32.xlu0 %v1849, 16
    %v2003 = vpop.permute.xlu0 %2002
    %2004 = vrot.lane.b32.xlu0 %v1947, 16
    %v2005 = vpop.permute.xlu0 %2004
    %2010 = vrot.lane.b32.xlu0 %v1833, 32
    %v2011 = vpop.permute.xlu0 %2010
    %2012 = vrot.lane.b32.xlu0 %v1931, 32
    %v2013 = vpop.permute.xlu0 %2012
    %2018 = vrot.lane.b32.xlu0 %v1850, 48
    %v2019 = vpop.permute.xlu0 %2018
    %2020 = vrot.lane.b32.xlu0 %v1948, 48
    %v2021 = vpop.permute.xlu0 %2020
    %2026 = vrot.lane.b32.xlu0 %v1841, 64
    %v2027 = vpop.permute.xlu0 %2026
    %2028 = vrot.lane.b32.xlu0 %v1939, 64
    %v2029 = vpop.permute.xlu0 %2028
    %2034 = vrot.lane.b32.xlu0 %v1851, 80
    %v2035 = vpop.permute.xlu0 %2034
    %2036 = vrot.lane.b32.xlu0 %v1949, 80
    %v2037 = vpop.permute.xlu0 %2036
    %2042 = vrot.lane.b32.xlu0 %v1848, 96
    %v2043 = vpop.permute.xlu0 %2042
    %2044 = vrot.lane.b32.xlu0 %v1946, 96
    %v2045 = vpop.permute.xlu0 %2044
    %2050 = vrot.lane.b32.xlu0 %v1852, 112
    %v2051 = vpop.permute.xlu0 %2050
    %2052 = vrot.lane.b32.xlu0 %v1950, 112
    %v2053 = vpop.permute.xlu0 %2052
    %2058 = vrot.lane.b32.xlu0 %v1898, 16
    %v2059 = vpop.permute.xlu0 %2058
    %2060 = vrot.lane.b32.xlu0 %v1996, 16
    %v2061 = vpop.permute.xlu0 %2060
    %2066 = vrot.lane.b32.xlu0 %v1882, 32
    %v2067 = vpop.permute.xlu0 %2066
    %2068 = vrot.lane.b32.xlu0 %v1980, 32
    %v2069 = vpop.permute.xlu0 %2068
    %2074 = vrot.lane.b32.xlu0 %v1899, 48
    %v2075 = vpop.permute.xlu0 %2074
    %2076 = vrot.lane.b32.xlu0 %v1997, 48
    %v2077 = vpop.permute.xlu0 %2076
    %2082 = vrot.lane.b32.xlu0 %v1890, 64
    %v2083 = vpop.permute.xlu0 %2082
    %2084 = vrot.lane.b32.xlu0 %v1988, 64
    %v2085 = vpop.permute.xlu0 %2084
    %2090 = vrot.lane.b32.xlu0 %v1900, 80
    %v2091 = vpop.permute.xlu0 %2090
    %2092 = vrot.lane.b32.xlu0 %v1998, 80
    %v2093 = vpop.permute.xlu0 %2092
    %2098 = vrot.lane.b32.xlu0 %v1897, 96
    %v2099 = vpop.permute.xlu0 %2098
    %2100 = vrot.lane.b32.xlu0 %v1995, 96
    %v2101 = vpop.permute.xlu0 %2100
    %2106 = vrot.lane.b32.xlu0 %v1901, 112
    %v2107 = vpop.permute.xlu0 %2106
    %2108 = vrot.lane.b32.xlu0 %v1999, 112
    %v2109 = vpop.permute.xlu0 %2108
    %vm2112 = vcmask 130048
    %v2113 = vsel %vm2112, %v1826, %v2003
    %v2114 = vsel %vm2112, %v1924, %v2005
    %vm2115 = vcmask 261120
    %v2116 = vsel %vm2115, %v2113, %v2011
    %v2117 = vsel %vm2115, %v2114, %v2013
    %vm2118 = vcmask 392192
    %v2119 = vsel %vm2118, %v2116, %v2019
    %v2120 = vsel %vm2118, %v2117, %v2021
    %vm2121 = vcmask 523264
    %v2122 = vsel %vm2121, %v2119, %v2027
    %v2123 = vsel %vm2121, %v2120, %v2029
    %vm2124 = vcmask 654336
    %v2125 = vsel %vm2124, %v2122, %v2035
    %v2126 = vsel %vm2124, %v2123, %v2037
    %vm2127 = vcmask 785408
    %v2128 = vsel %vm2127, %v2125, %v2043
    %v2129 = vsel %vm2127, %v2126, %v2045
    %vm2130 = vcmask 916480
    %v2131 = vsel %vm2130, %v2128, %v2051
    %v2132 = vsel %vm2130, %v2129, %v2053
    %v2133 = vsel %vm2112, %v1875, %v2059
    %v2134 = vsel %vm2112, %v1973, %v2061
    %v2135 = vsel %vm2115, %v2133, %v2067
    %v2136 = vsel %vm2115, %v2134, %v2069
    %v2137 = vsel %vm2118, %v2135, %v2075
    %v2138 = vsel %vm2118, %v2136, %v2077
    %v2139 = vsel %vm2121, %v2137, %v2083
    %v2140 = vsel %vm2121, %v2138, %v2085
    %v2141 = vsel %vm2124, %v2139, %v2091
    %v2142 = vsel %vm2124, %v2140, %v2093
    %v2143 = vsel %vm2127, %v2141, %v2099
    %v2144 = vsel %vm2127, %v2142, %v2101
    %v2145 = vsel %vm2130, %v2143, %v2107
    %v2146 = vsel %vm2130, %v2144, %v2109
    %v2147 = vld [vmem:[%s0] sm:$0xff]
    %v2148 = vld [vmem:[%s0 + $0x8] sm:$0xff]
    %v2149 = vlaneseq
    %v2150 = vshrl.u32 %v2149, 7
    %v2151 = vsub.s32 0, %v2150
    %v2152 = vrot.slane %v2131, %v2151
    %v2153 = vlaneseq
    %v2154 = vshrl.u32 %v2153, 7
    %v2155 = vsub.s32 0, %v2154
    %v2156 = vrot.slane %v2145, %v2155
    %v2157 = vlaneseq
    %v2158 = vshrl.u32 %v2157, 7
    %v2159 = vsub.s32 0, %v2158
    %v2160 = vrot.slane %v2132, %v2159
    %v2161 = vlaneseq
    %v2162 = vshrl.u32 %v2161, 7
    %v2163 = vsub.s32 0, %v2162
    %v2164 = vrot.slane %v2146, %v2163
    %v2167 = vcombine.high %v2147, %v2147
    %v2168 = vcombine.high %v2148, %v2148
    %v2171 = vmul.f32 %v2152, %v2147
    %v2172 = vmul.f32 %v2156, %v2167
    %v2173 = vmul.f32 %v2160, %v2148
    %v2174 = vmul.f32 %v2164, %v2168
    %v2179 = vcombine.low %v2171, %v2172
    %v2180 = vcombine.low %v2173, %v2174
    %2183 = vst [vmem:[%s3] sm:$0xff] %v2179
    %2184 = vst [vmem:[%s3 + $0x8] sm:$0xff] %v2180
    // Predicated region
    $region18: #{spatial_attention_forward.1} parent=1 // pred_check
      _
    $region19: #{spatial_attention_forward.1} parent=1 // pred_check_branch
      %2186 = sbr.rel (0) target = $region21
    $region20: #{spatial_attention_forward.1} parent=1 // pred_region
      _
    $region21: #{spatial_attention_forward.1} parent=1 // pred_fallthru
      _
    // Predicated region
    $region22: #{spatial_attention_forward.1} parent=1 // pred_check
      _
    $region23: #{spatial_attention_forward.1} parent=1 // pred_check_branch
      %2188 = sbr.rel (0) target = $region25
    $region24: #{spatial_attention_forward.1} parent=1 // pred_region
      _
    $region25: #{spatial_attention_forward.1} parent=1 // pred_fallthru
      _
    %2189 = vsyncpa [#allocation5], 1

</llo_original>
